<compile_context>
chip_gen: v6e
topology: v6e:2x2x1
jax: 0.10.0
libtpu: 0.0.40
codegen_flags: <defaults>
</compile_context>

<pallas_src>
import functools

import jax
import jax.numpy as jnp
import numpy as np
from jax.experimental import pallas as pl
from jax.experimental.pallas import tpu as pltpu

KH, KW = 3, 3  # fixed 3x3 depthwise kernel


def _dwconv_kernel(x_ref, w_ref, o_ref, *, c_blk):
    """One (channel-block, batch) grid step.

    x_ref: (1, 1, H+2, (W+2)*c_blk)  zero-padded input tile (VMEM)
    w_ref: (1, KH, KW, c_blk)        per-channel filter tile (VMEM)
    o_ref: (1, 1, H, W*c_blk)        output tile (VMEM)
    """
    H = o_ref.shape[2]
    W = o_ref.shape[3] // c_blk

    # Fully unrolled: W output column-groups x 9 taps.  All lane offsets are
    # multiples of 128 (c_blk % 128 == 0) -> aligned loads/stores; the only
    # misaligned accesses are the cheap kh sublane offsets (0/1/2).
    for w in range(W):
        acc = jnp.zeros((H, c_blk), jnp.float32)
        for kh in range(KH):
            for kw in range(KW):
                lane0 = (w + kw) * c_blk
                patch = x_ref[0, 0, kh:kh + H, lane0:lane0 + c_blk].astype(jnp.float32)
                wtap = w_ref[0, kh, kw, :].astype(jnp.float32)  # (c_blk,) on lanes
                acc = acc + patch * wtap
        o_ref[0, 0, :, w * c_blk:(w + 1) * c_blk] = acc.astype(o_ref.dtype)


def _pick_c_blk(C, cap=1152):
    """Largest multiple-of-128 channel tile that divides C, <= cap, and (when
    possible) leaves >= 2 channel blocks so both v7x TensorCores stay busy."""
    if C % 128 != 0:
        raise ValueError("channel count must be a multiple of 128")
    candidates = [b for b in range(128, min(C, cap) + 1, 128) if C % b == 0]
    two_plus = [b for b in candidates if C // b >= 2]
    return max(two_plus) if two_plus else max(candidates)


def _depthwise_conv2d_blocked(xb, wb, *, out_dtype):
    """Kernel-native entry point (no transposes / pads at the HBM level).

    xb: (N, nb, H+2, (W+2)*c_blk)  zero-padded, channel-blocked, channels-last
    wb: (nb, KH, KW, c_blk)        per-channel filters
    returns: (N, nb, H, W*c_blk)
    """
    N, nb, Hp2, WC2 = xb.shape
    c_blk = wb.shape[-1]
    H = Hp2 - 2
    W = WC2 // c_blk - 2

    kernel = functools.partial(_dwconv_kernel, c_blk=c_blk)
    return pl.pallas_call(
        kernel,
        out_shape=jax.ShapeDtypeStruct((N, nb, H, W * c_blk), out_dtype),
        grid_spec=pltpu.PrefetchScalarGridSpec(
            num_scalar_prefetch=0,
            # Channel blocks outer, batch inner: the weight tile's block index
            # is constant across the inner axis, so it stays resident.
            grid=(nb, N),
            in_specs=[
                pl.BlockSpec((1, 1, Hp2, WC2), lambda c, n: (n, c, 0, 0)),
                pl.BlockSpec((1, KH, KW, c_blk), lambda c, n: (c, 0, 0, 0)),
            ],
            out_specs=pl.BlockSpec((1, 1, H, W * c_blk), lambda c, n: (n, c, 0, 0)),
        ),
        compiler_params=pltpu.CompilerParams(
            dimension_semantics=("parallel", "parallel"),
        ),
    )(xb, wb)


@functools.partial(jax.jit, static_argnames=("c_blk",))
def depthwise_conv2d_nchw(x, weight, *, c_blk=None):
    """Matches PyTorch Conv2d(C, C, 3, stride=1, padding=1, groups=C, bias=False).

    x: (N, C, H, W); weight: (C, 1, 3, 3).  The NCHW<->blocked relayout below is
    glue to match the PyTorch module boundary; fuse it into the surrounding
    model (use `_depthwise_conv2d_blocked`) to drop it entirely.
    """
    N, C, H, W = x.shape
    assert weight.shape == (C, 1, KH, KW)
    if c_blk is None:
        c_blk = _pick_c_blk(C)
    nb = C // c_blk

    # Single relayout pass: NCHW -> blocked channels-last, with the zero
    # padding fused into the same op chain (no standalone full-tensor pad pass).
    xb = x.reshape(N, nb, c_blk, H, W)
    xb = jnp.transpose(xb, (0, 1, 3, 4, 2))                     # (N, nb, H, W, c_blk)
    xb = jnp.pad(xb, ((0, 0), (0, 0), (1, 1), (1, 1), (0, 0)))  # (N, nb, H+2, W+2, c_blk)
    xb = xb.reshape(N, nb, H + 2, (W + 2) * c_blk)              # free reshape

    # (C, 1, 3, 3) -> (nb, 3, 3, c_blk)  (tiny; negligible cost)
    wb = jnp.transpose(weight[:, 0].reshape(nb, c_blk, KH, KW), (0, 2, 3, 1))

    out = _depthwise_conv2d_blocked(xb, wb, out_dtype=x.dtype)

    # blocked channels-last -> NCHW (glue for the spec boundary)
    out = out.reshape(N, nb, H, W, c_blk)
    out = jnp.transpose(out, (0, 1, 4, 2, 3)).reshape(N, C, H, W)
    return out


if __name__ == "__main__":
    # Small shapes consistent with the module (original was (1, 2304, 7, 7)):
    # depthwise 3x3 conv, stride 1, pad 1, no bias.
    N, C, H, W = 2, 256, 7, 7
    key = jax.random.PRNGKey(0)
    kx, kw_ = jax.random.split(key)
    x = jax.random.normal(kx, (N, C, H, W), dtype=jnp.float32)
    weight = jax.random.normal(kw_, (C, 1, KH, KW), dtype=jnp.float32) * 0.1

    out = jax.block_until_ready(depthwise_conv2d_nchw(x, weight))

    # Reference: XLA grouped conv (same semantics as Conv2d(groups=C, bias=False)).
    ref = jax.block_until_ready(
        jax.lax.conv_general_dilated(
            x, weight,
            window_strides=(1, 1),
            padding=((1, 1), (1, 1)),
            dimension_numbers=("NCHW", "OIHW", "NCHW"),
            feature_group_count=C,
        )
    )
    assert out.shape == (N, C, H, W)
    np.testing.assert_allclose(np.asarray(out), np.asarray(ref), rtol=1e-5, atol=1e-5)

    print("KERNEL_OK")
</pallas_src>

<mosaic_0001>
module attributes {stable_mosaic.version = 11 : i64} {
  func.func @_dwconv_kernel(%arg0: i32, %arg1: i32, %arg2: memref<1x1x9x1152xf32, #tpu.memory_space<vmem>>, %arg3: memref<1x3x3x128xf32, #tpu.memory_space<vmem>>, %arg4: memref<1x1x7x896xf32, #tpu.memory_space<vmem>>) attributes {dimension_semantics = [#tpu.dimension_semantics<parallel>, #tpu.dimension_semantics<parallel>], iteration_bounds = array<i64: 2, 2>, scalar_prefetch = 0 : i64, scratch_operands = 0 : i64, tpu.core_type = #tpu.core_type<tc>, window_params = [{transform_indices = @transform_0, window_bounds = array<i64: 1, 1, 9, 1152>}, {transform_indices = @transform_1, window_bounds = array<i64: 1, 3, 3, 128>}, {transform_indices = @transform_2, window_bounds = array<i64: 1, 1, 7, 896>}]} {
    %cst = arith.constant 0.000000e+00 : f32
    %0 = vector.broadcast %cst : f32 to vector<7x128xf32>
    %c0 = arith.constant 0 : index
    %c0_0 = arith.constant 0 : index
    %c0_1 = arith.constant 0 : index
    %c0_2 = arith.constant 0 : index
    %1 = vector.load %arg2[%c0, %c0_0, %c0_1, %c0_2] : memref<1x1x9x1152xf32, #tpu.memory_space<vmem>>, vector<1x1x7x128xf32>
    %2 = vector.shape_cast %1 : vector<1x1x7x128xf32> to vector<7x128xf32>
    %c0_3 = arith.constant 0 : index
    %c0_4 = arith.constant 0 : index
    %c0_5 = arith.constant 0 : index
    %c0_6 = arith.constant 0 : index
    %3 = vector.load %arg3[%c0_3, %c0_4, %c0_5, %c0_6] : memref<1x3x3x128xf32, #tpu.memory_space<vmem>>, vector<1x1x1x128xf32>
    %4 = vector.shape_cast %3 : vector<1x1x1x128xf32> to vector<128xf32>
    %5 = vector.shape_cast %4 : vector<128xf32> to vector<1x128xf32>
    %6 = vector.broadcast %5 : vector<1x128xf32> to vector<7x128xf32>
    %7 = arith.mulf %2, %6 : vector<7x128xf32>
    %8 = arith.addf %0, %7 : vector<7x128xf32>
    %c0_7 = arith.constant 0 : index
    %c0_8 = arith.constant 0 : index
    %c0_9 = arith.constant 0 : index
    %c128 = arith.constant 128 : index
    %9 = vector.load %arg2[%c0_7, %c0_8, %c0_9, %c128] : memref<1x1x9x1152xf32, #tpu.memory_space<vmem>>, vector<1x1x7x128xf32>
    %10 = vector.shape_cast %9 : vector<1x1x7x128xf32> to vector<7x128xf32>
    %c0_10 = arith.constant 0 : index
    %c0_11 = arith.constant 0 : index
    %c1 = arith.constant 1 : index
    %c0_12 = arith.constant 0 : index
    %11 = vector.load %arg3[%c0_10, %c0_11, %c1, %c0_12] : memref<1x3x3x128xf32, #tpu.memory_space<vmem>>, vector<1x1x1x128xf32>
    %12 = vector.shape_cast %11 : vector<1x1x1x128xf32> to vector<128xf32>
    %13 = vector.shape_cast %12 : vector<128xf32> to vector<1x128xf32>
    %14 = vector.broadcast %13 : vector<1x128xf32> to vector<7x128xf32>
    %15 = arith.mulf %10, %14 : vector<7x128xf32>
    %16 = arith.addf %8, %15 : vector<7x128xf32>
    %c0_13 = arith.constant 0 : index
    %c0_14 = arith.constant 0 : index
    %c0_15 = arith.constant 0 : index
    %c256 = arith.constant 256 : index
    %17 = vector.load %arg2[%c0_13, %c0_14, %c0_15, %c256] : memref<1x1x9x1152xf32, #tpu.memory_space<vmem>>, vector<1x1x7x128xf32>
    %18 = vector.shape_cast %17 : vector<1x1x7x128xf32> to vector<7x128xf32>
    %c0_16 = arith.constant 0 : index
    %c0_17 = arith.constant 0 : index
    %c2 = arith.constant 2 : index
    %c0_18 = arith.constant 0 : index
    %19 = vector.load %arg3[%c0_16, %c0_17, %c2, %c0_18] : memref<1x3x3x128xf32, #tpu.memory_space<vmem>>, vector<1x1x1x128xf32>
    %20 = vector.shape_cast %19 : vector<1x1x1x128xf32> to vector<128xf32>
    %21 = vector.shape_cast %20 : vector<128xf32> to vector<1x128xf32>
    %22 = vector.broadcast %21 : vector<1x128xf32> to vector<7x128xf32>
    %23 = arith.mulf %18, %22 : vector<7x128xf32>
    %24 = arith.addf %16, %23 : vector<7x128xf32>
    %c0_19 = arith.constant 0 : index
    %c0_20 = arith.constant 0 : index
    %c1_21 = arith.constant 1 : index
    %c0_22 = arith.constant 0 : index
    %25 = vector.load %arg2[%c0_19, %c0_20, %c1_21, %c0_22] : memref<1x1x9x1152xf32, #tpu.memory_space<vmem>>, vector<1x1x7x128xf32>
    %26 = vector.shape_cast %25 : vector<1x1x7x128xf32> to vector<7x128xf32>
    %c0_23 = arith.constant 0 : index
    %c1_24 = arith.constant 1 : index
    %c0_25 = arith.constant 0 : index
    %c0_26 = arith.constant 0 : index
    %27 = vector.load %arg3[%c0_23, %c1_24, %c0_25, %c0_26] : memref<1x3x3x128xf32, #tpu.memory_space<vmem>>, vector<1x1x1x128xf32>
    %28 = vector.shape_cast %27 : vector<1x1x1x128xf32> to vector<128xf32>
    %29 = vector.shape_cast %28 : vector<128xf32> to vector<1x128xf32>
    %30 = vector.broadcast %29 : vector<1x128xf32> to vector<7x128xf32>
    %31 = arith.mulf %26, %30 : vector<7x128xf32>
    %32 = arith.addf %24, %31 : vector<7x128xf32>
    %c0_27 = arith.constant 0 : index
    %c0_28 = arith.constant 0 : index
    %c1_29 = arith.constant 1 : index
    %c128_30 = arith.constant 128 : index
    %33 = vector.load %arg2[%c0_27, %c0_28, %c1_29, %c128_30] : memref<1x1x9x1152xf32, #tpu.memory_space<vmem>>, vector<1x1x7x128xf32>
    %34 = vector.shape_cast %33 : vector<1x1x7x128xf32> to vector<7x128xf32>
    %c0_31 = arith.constant 0 : index
    %c1_32 = arith.constant 1 : index
    %c1_33 = arith.constant 1 : index
    %c0_34 = arith.constant 0 : index
    %35 = vector.load %arg3[%c0_31, %c1_32, %c1_33, %c0_34] : memref<1x3x3x128xf32, #tpu.memory_space<vmem>>, vector<1x1x1x128xf32>
    %36 = vector.shape_cast %35 : vector<1x1x1x128xf32> to vector<128xf32>
    %37 = vector.shape_cast %36 : vector<128xf32> to vector<1x128xf32>
    %38 = vector.broadcast %37 : vector<1x128xf32> to vector<7x128xf32>
    %39 = arith.mulf %34, %38 : vector<7x128xf32>
    %40 = arith.addf %32, %39 : vector<7x128xf32>
    %c0_35 = arith.constant 0 : index
    %c0_36 = arith.constant 0 : index
    %c1_37 = arith.constant 1 : index
    %c256_38 = arith.constant 256 : index
    %41 = vector.load %arg2[%c0_35, %c0_36, %c1_37, %c256_38] : memref<1x1x9x1152xf32, #tpu.memory_space<vmem>>, vector<1x1x7x128xf32>
    %42 = vector.shape_cast %41 : vector<1x1x7x128xf32> to vector<7x128xf32>
    %c0_39 = arith.constant 0 : index
    %c1_40 = arith.constant 1 : index
    %c2_41 = arith.constant 2 : index
    %c0_42 = arith.constant 0 : index
    %43 = vector.load %arg3[%c0_39, %c1_40, %c2_41, %c0_42] : memref<1x3x3x128xf32, #tpu.memory_space<vmem>>, vector<1x1x1x128xf32>
    %44 = vector.shape_cast %43 : vector<1x1x1x128xf32> to vector<128xf32>
    %45 = vector.shape_cast %44 : vector<128xf32> to vector<1x128xf32>
    %46 = vector.broadcast %45 : vector<1x128xf32> to vector<7x128xf32>
    %47 = arith.mulf %42, %46 : vector<7x128xf32>
    %48 = arith.addf %40, %47 : vector<7x128xf32>
    %c0_43 = arith.constant 0 : index
    %c0_44 = arith.constant 0 : index
    %c2_45 = arith.constant 2 : index
    %c0_46 = arith.constant 0 : index
    %49 = vector.load %arg2[%c0_43, %c0_44, %c2_45, %c0_46] : memref<1x1x9x1152xf32, #tpu.memory_space<vmem>>, vector<1x1x7x128xf32>
    %50 = vector.shape_cast %49 : vector<1x1x7x128xf32> to vector<7x128xf32>
    %c0_47 = arith.constant 0 : index
    %c2_48 = arith.constant 2 : index
    %c0_49 = arith.constant 0 : index
    %c0_50 = arith.constant 0 : index
    %51 = vector.load %arg3[%c0_47, %c2_48, %c0_49, %c0_50] : memref<1x3x3x128xf32, #tpu.memory_space<vmem>>, vector<1x1x1x128xf32>
    %52 = vector.shape_cast %51 : vector<1x1x1x128xf32> to vector<128xf32>
    %53 = vector.shape_cast %52 : vector<128xf32> to vector<1x128xf32>
    %54 = vector.broadcast %53 : vector<1x128xf32> to vector<7x128xf32>
    %55 = arith.mulf %50, %54 : vector<7x128xf32>
    %56 = arith.addf %48, %55 : vector<7x128xf32>
    %c0_51 = arith.constant 0 : index
    %c0_52 = arith.constant 0 : index
    %c2_53 = arith.constant 2 : index
    %c128_54 = arith.constant 128 : index
    %57 = vector.load %arg2[%c0_51, %c0_52, %c2_53, %c128_54] : memref<1x1x9x1152xf32, #tpu.memory_space<vmem>>, vector<1x1x7x128xf32>
    %58 = vector.shape_cast %57 : vector<1x1x7x128xf32> to vector<7x128xf32>
    %c0_55 = arith.constant 0 : index
    %c2_56 = arith.constant 2 : index
    %c1_57 = arith.constant 1 : index
    %c0_58 = arith.constant 0 : index
    %59 = vector.load %arg3[%c0_55, %c2_56, %c1_57, %c0_58] : memref<1x3x3x128xf32, #tpu.memory_space<vmem>>, vector<1x1x1x128xf32>
    %60 = vector.shape_cast %59 : vector<1x1x1x128xf32> to vector<128xf32>
    %61 = vector.shape_cast %60 : vector<128xf32> to vector<1x128xf32>
    %62 = vector.broadcast %61 : vector<1x128xf32> to vector<7x128xf32>
    %63 = arith.mulf %58, %62 : vector<7x128xf32>
    %64 = arith.addf %56, %63 : vector<7x128xf32>
    %c0_59 = arith.constant 0 : index
    %c0_60 = arith.constant 0 : index
    %c2_61 = arith.constant 2 : index
    %c256_62 = arith.constant 256 : index
    %65 = vector.load %arg2[%c0_59, %c0_60, %c2_61, %c256_62] : memref<1x1x9x1152xf32, #tpu.memory_space<vmem>>, vector<1x1x7x128xf32>
    %66 = vector.shape_cast %65 : vector<1x1x7x128xf32> to vector<7x128xf32>
    %c0_63 = arith.constant 0 : index
    %c2_64 = arith.constant 2 : index
    %c2_65 = arith.constant 2 : index
    %c0_66 = arith.constant 0 : index
    %67 = vector.load %arg3[%c0_63, %c2_64, %c2_65, %c0_66] : memref<1x3x3x128xf32, #tpu.memory_space<vmem>>, vector<1x1x1x128xf32>
    %68 = vector.shape_cast %67 : vector<1x1x1x128xf32> to vector<128xf32>
    %69 = vector.shape_cast %68 : vector<128xf32> to vector<1x128xf32>
    %70 = vector.broadcast %69 : vector<1x128xf32> to vector<7x128xf32>
    %71 = arith.mulf %66, %70 : vector<7x128xf32>
    %72 = arith.addf %64, %71 : vector<7x128xf32>
    %c0_67 = arith.constant 0 : index
    %c0_68 = arith.constant 0 : index
    %c0_69 = arith.constant 0 : index
    %c0_70 = arith.constant 0 : index
    %73 = vector.load %arg4[%c0_67, %c0_68, %c0_69, %c0_70] : memref<1x1x7x896xf32, #tpu.memory_space<vmem>>, vector<1x1x7x128xf32>
    %74 = vector.shape_cast %73 : vector<1x1x7x128xf32> to vector<7x128xf32>
    %75 = vector.shape_cast %72 : vector<7x128xf32> to vector<1x1x7x128xf32>
    tpu.vector_store %arg4[%c0_67, %c0_68, %c0_69, %c0_70], %75 {strides = array<i32>} : memref<1x1x7x896xf32, #tpu.memory_space<vmem>>, vector<1x1x7x128xf32>,
    %cst_71 = arith.constant 0.000000e+00 : f32
    %76 = vector.broadcast %cst_71 : f32 to vector<7x128xf32>
    %c0_72 = arith.constant 0 : index
    %c0_73 = arith.constant 0 : index
    %c0_74 = arith.constant 0 : index
    %c128_75 = arith.constant 128 : index
    %77 = vector.load %arg2[%c0_72, %c0_73, %c0_74, %c128_75] : memref<1x1x9x1152xf32, #tpu.memory_space<vmem>>, vector<1x1x7x128xf32>
    %78 = vector.shape_cast %77 : vector<1x1x7x128xf32> to vector<7x128xf32>
    %c0_76 = arith.constant 0 : index
    %c0_77 = arith.constant 0 : index
    %c0_78 = arith.constant 0 : index
    %c0_79 = arith.constant 0 : index
    %79 = vector.load %arg3[%c0_76, %c0_77, %c0_78, %c0_79] : memref<1x3x3x128xf32, #tpu.memory_space<vmem>>, vector<1x1x1x128xf32>
    %80 = vector.shape_cast %79 : vector<1x1x1x128xf32> to vector<128xf32>
    %81 = vector.shape_cast %80 : vector<128xf32> to vector<1x128xf32>
    %82 = vector.broadcast %81 : vector<1x128xf32> to vector<7x128xf32>
    %83 = arith.mulf %78, %82 : vector<7x128xf32>
    %84 = arith.addf %76, %83 : vector<7x128xf32>
    %c0_80 = arith.constant 0 : index
    %c0_81 = arith.constant 0 : index
    %c0_82 = arith.constant 0 : index
    %c256_83 = arith.constant 256 : index
    %85 = vector.load %arg2[%c0_80, %c0_81, %c0_82, %c256_83] : memref<1x1x9x1152xf32, #tpu.memory_space<vmem>>, vector<1x1x7x128xf32>
    %86 = vector.shape_cast %85 : vector<1x1x7x128xf32> to vector<7x128xf32>
    %c0_84 = arith.constant 0 : index
    %c0_85 = arith.constant 0 : index
    %c1_86 = arith.constant 1 : index
    %c0_87 = arith.constant 0 : index
    %87 = vector.load %arg3[%c0_84, %c0_85, %c1_86, %c0_87] : memref<1x3x3x128xf32, #tpu.memory_space<vmem>>, vector<1x1x1x128xf32>
    %88 = vector.shape_cast %87 : vector<1x1x1x128xf32> to vector<128xf32>
    %89 = vector.shape_cast %88 : vector<128xf32> to vector<1x128xf32>
    %90 = vector.broadcast %89 : vector<1x128xf32> to vector<7x128xf32>
    %91 = arith.mulf %86, %90 : vector<7x128xf32>
    %92 = arith.addf %84, %91 : vector<7x128xf32>
    %c0_88 = arith.constant 0 : index
    %c0_89 = arith.constant 0 : index
    %c0_90 = arith.constant 0 : index
    %c384 = arith.constant 384 : index
    %93 = vector.load %arg2[%c0_88, %c0_89, %c0_90, %c384] : memref<1x1x9x1152xf32, #tpu.memory_space<vmem>>, vector<1x1x7x128xf32>
    %94 = vector.shape_cast %93 : vector<1x1x7x128xf32> to vector<7x128xf32>
    %c0_91 = arith.constant 0 : index
    %c0_92 = arith.constant 0 : index
    %c2_93 = arith.constant 2 : index
    %c0_94 = arith.constant 0 : index
    %95 = vector.load %arg3[%c0_91, %c0_92, %c2_93, %c0_94] : memref<1x3x3x128xf32, #tpu.memory_space<vmem>>, vector<1x1x1x128xf32>
    %96 = vector.shape_cast %95 : vector<1x1x1x128xf32> to vector<128xf32>
    %97 = vector.shape_cast %96 : vector<128xf32> to vector<1x128xf32>
    %98 = vector.broadcast %97 : vector<1x128xf32> to vector<7x128xf32>
    %99 = arith.mulf %94, %98 : vector<7x128xf32>
    %100 = arith.addf %92, %99 : vector<7x128xf32>
    %c0_95 = arith.constant 0 : index
    %c0_96 = arith.constant 0 : index
    %c1_97 = arith.constant 1 : index
    %c128_98 = arith.constant 128 : index
    %101 = vector.load %arg2[%c0_95, %c0_96, %c1_97, %c128_98] : memref<1x1x9x1152xf32, #tpu.memory_space<vmem>>, vector<1x1x7x128xf32>
    %102 = vector.shape_cast %101 : vector<1x1x7x128xf32> to vector<7x128xf32>
    %c0_99 = arith.constant 0 : index
    %c1_100 = arith.constant 1 : index
    %c0_101 = arith.constant 0 : index
    %c0_102 = arith.constant 0 : index
    %103 = vector.load %arg3[%c0_99, %c1_100, %c0_101, %c0_102] : memref<1x3x3x128xf32, #tpu.memory_space<vmem>>, vector<1x1x1x128xf32>
    %104 = vector.shape_cast %103 : vector<1x1x1x128xf32> to vector<128xf32>
    %105 = vector.shape_cast %104 : vector<128xf32> to vector<1x128xf32>
    %106 = vector.broadcast %105 : vector<1x128xf32> to vector<7x128xf32>
    %107 = arith.mulf %102, %106 : vector<7x128xf32>
    %108 = arith.addf %100, %107 : vector<7x128xf32>
    %c0_103 = arith.constant 0 : index
    %c0_104 = arith.constant 0 : index
    %c1_105 = arith.constant 1 : index
    %c256_106 = arith.constant 256 : index
    %109 = vector.load %arg2[%c0_103, %c0_104, %c1_105, %c256_106] : memref<1x1x9x1152xf32, #tpu.memory_space<vmem>>, vector<1x1x7x128xf32>
    %110 = vector.shape_cast %109 : vector<1x1x7x128xf32> to vector<7x128xf32>
    %c0_107 = arith.constant 0 : index
    %c1_108 = arith.constant 1 : index
    %c1_109 = arith.constant 1 : index
    %c0_110 = arith.constant 0 : index
    %111 = vector.load %arg3[%c0_107, %c1_108, %c1_109, %c0_110] : memref<1x3x3x128xf32, #tpu.memory_space<vmem>>, vector<1x1x1x128xf32>
    %112 = vector.shape_cast %111 : vector<1x1x1x128xf32> to vector<128xf32>
    %113 = vector.shape_cast %112 : vector<128xf32> to vector<1x128xf32>
    %114 = vector.broadcast %113 : vector<1x128xf32> to vector<7x128xf32>
    %115 = arith.mulf %110, %114 : vector<7x128xf32>
    %116 = arith.addf %108, %115 : vector<7x128xf32>
    %c0_111 = arith.constant 0 : index
    %c0_112 = arith.constant 0 : index
    %c1_113 = arith.constant 1 : index
    %c384_114 = arith.constant 384 : index
    %117 = vector.load %arg2[%c0_111, %c0_112, %c1_113, %c384_114] : memref<1x1x9x1152xf32, #tpu.memory_space<vmem>>, vector<1x1x7x128xf32>
    %118 = vector.shape_cast %117 : vector<1x1x7x128xf32> to vector<7x128xf32>
    %c0_115 = arith.constant 0 : index
    %c1_116 = arith.constant 1 : index
    %c2_117 = arith.constant 2 : index
    %c0_118 = arith.constant 0 : index
    %119 = vector.load %arg3[%c0_115, %c1_116, %c2_117, %c0_118] : memref<1x3x3x128xf32, #tpu.memory_space<vmem>>, vector<1x1x1x128xf32>
    %120 = vector.shape_cast %119 : vector<1x1x1x128xf32> to vector<128xf32>
    %121 = vector.shape_cast %120 : vector<128xf32> to vector<1x128xf32>
    %122 = vector.broadcast %121 : vector<1x128xf32> to vector<7x128xf32>
    %123 = arith.mulf %118, %122 : vector<7x128xf32>
    %124 = arith.addf %116, %123 : vector<7x128xf32>
    %c0_119 = arith.constant 0 : index
    %c0_120 = arith.constant 0 : index
    %c2_121 = arith.constant 2 : index
    %c128_122 = arith.constant 128 : index
    %125 = vector.load %arg2[%c0_119, %c0_120, %c2_121, %c128_122] : memref<1x1x9x1152xf32, #tpu.memory_space<vmem>>, vector<1x1x7x128xf32>
    %126 = vector.shape_cast %125 : vector<1x1x7x128xf32> to vector<7x128xf32>
    %c0_123 = arith.constant 0 : index
    %c2_124 = arith.constant 2 : index
    %c0_125 = arith.constant 0 : index
    %c0_126 = arith.constant 0 : index
    %127 = vector.load %arg3[%c0_123, %c2_124, %c0_125, %c0_126] : memref<1x3x3x128xf32, #tpu.memory_space<vmem>>, vector<1x1x1x128xf32>
    %128 = vector.shape_cast %127 : vector<1x1x1x128xf32> to vector<128xf32>
    %129 = vector.shape_cast %128 : vector<128xf32> to vector<1x128xf32>
    %130 = vector.broadcast %129 : vector<1x128xf32> to vector<7x128xf32>
    %131 = arith.mulf %126, %130 : vector<7x128xf32>
    %132 = arith.addf %124, %131 : vector<7x128xf32>
    %c0_127 = arith.constant 0 : index
    %c0_128 = arith.constant 0 : index
    %c2_129 = arith.constant 2 : index
    %c256_130 = arith.constant 256 : index
    %133 = vector.load %arg2[%c0_127, %c0_128, %c2_129, %c256_130] : memref<1x1x9x1152xf32, #tpu.memory_space<vmem>>, vector<1x1x7x128xf32>
    %134 = vector.shape_cast %133 : vector<1x1x7x128xf32> to vector<7x128xf32>
    %c0_131 = arith.constant 0 : index
    %c2_132 = arith.constant 2 : index
    %c1_133 = arith.constant 1 : index
    %c0_134 = arith.constant 0 : index
    %135 = vector.load %arg3[%c0_131, %c2_132, %c1_133, %c0_134] : memref<1x3x3x128xf32, #tpu.memory_space<vmem>>, vector<1x1x1x128xf32>
    %136 = vector.shape_cast %135 : vector<1x1x1x128xf32> to vector<128xf32>
    %137 = vector.shape_cast %136 : vector<128xf32> to vector<1x128xf32>
    %138 = vector.broadcast %137 : vector<1x128xf32> to vector<7x128xf32>
    %139 = arith.mulf %134, %138 : vector<7x128xf32>
    %140 = arith.addf %132, %139 : vector<7x128xf32>
    %c0_135 = arith.constant 0 : index
    %c0_136 = arith.constant 0 : index
    %c2_137 = arith.constant 2 : index
    %c384_138 = arith.constant 384 : index
    %141 = vector.load %arg2[%c0_135, %c0_136, %c2_137, %c384_138] : memref<1x1x9x1152xf32, #tpu.memory_space<vmem>>, vector<1x1x7x128xf32>
    %142 = vector.shape_cast %141 : vector<1x1x7x128xf32> to vector<7x128xf32>
    %c0_139 = arith.constant 0 : index
    %c2_140 = arith.constant 2 : index
    %c2_141 = arith.constant 2 : index
    %c0_142 = arith.constant 0 : index
    %143 = vector.load %arg3[%c0_139, %c2_140, %c2_141, %c0_142] : memref<1x3x3x128xf32, #tpu.memory_space<vmem>>, vector<1x1x1x128xf32>
    %144 = vector.shape_cast %143 : vector<1x1x1x128xf32> to vector<128xf32>
    %145 = vector.shape_cast %144 : vector<128xf32> to vector<1x128xf32>
    %146 = vector.broadcast %145 : vector<1x128xf32> to vector<7x128xf32>
    %147 = arith.mulf %142, %146 : vector<7x128xf32>
    %148 = arith.addf %140, %147 : vector<7x128xf32>
    %c0_143 = arith.constant 0 : index
    %c0_144 = arith.constant 0 : index
    %c0_145 = arith.constant 0 : index
    %c128_146 = arith.constant 128 : index
    %149 = vector.load %arg4[%c0_143, %c0_144, %c0_145, %c128_146] : memref<1x1x7x896xf32, #tpu.memory_space<vmem>>, vector<1x1x7x128xf32>
    %150 = vector.shape_cast %149 : vector<1x1x7x128xf32> to vector<7x128xf32>
    %151 = vector.shape_cast %148 : vector<7x128xf32> to vector<1x1x7x128xf32>
    tpu.vector_store %arg4[%c0_143, %c0_144, %c0_145, %c128_146], %151 {strides = array<i32>} : memref<1x1x7x896xf32, #tpu.memory_space<vmem>>, vector<1x1x7x128xf32>,
    %cst_147 = arith.constant 0.000000e+00 : f32
    %152 = vector.broadcast %cst_147 : f32 to vector<7x128xf32>
    %c0_148 = arith.constant 0 : index
    %c0_149 = arith.constant 0 : index
    %c0_150 = arith.constant 0 : index
    %c256_151 = arith.constant 256 : index
    %153 = vector.load %arg2[%c0_148, %c0_149, %c0_150, %c256_151] : memref<1x1x9x1152xf32, #tpu.memory_space<vmem>>, vector<1x1x7x128xf32>
    %154 = vector.shape_cast %153 : vector<1x1x7x128xf32> to vector<7x128xf32>
    %c0_152 = arith.constant 0 : index
    %c0_153 = arith.constant 0 : index
    %c0_154 = arith.constant 0 : index
    %c0_155 = arith.constant 0 : index
    %155 = vector.load %arg3[%c0_152, %c0_153, %c0_154, %c0_155] : memref<1x3x3x128xf32, #tpu.memory_space<vmem>>, vector<1x1x1x128xf32>
    %156 = vector.shape_cast %155 : vector<1x1x1x128xf32> to vector<128xf32>
    %157 = vector.shape_cast %156 : vector<128xf32> to vector<1x128xf32>
    %158 = vector.broadcast %157 : vector<1x128xf32> to vector<7x128xf32>
    %159 = arith.mulf %154, %158 : vector<7x128xf32>
    %160 = arith.addf %152, %159 : vector<7x128xf32>
    %c0_156 = arith.constant 0 : index
    %c0_157 = arith.constant 0 : index
    %c0_158 = arith.constant 0 : index
    %c384_159 = arith.constant 384 : index
    %161 = vector.load %arg2[%c0_156, %c0_157, %c0_158, %c384_159] : memref<1x1x9x1152xf32, #tpu.memory_space<vmem>>, vector<1x1x7x128xf32>
    %162 = vector.shape_cast %161 : vector<1x1x7x128xf32> to vector<7x128xf32>
    %c0_160 = arith.constant 0 : index
    %c0_161 = arith.constant 0 : index
    %c1_162 = arith.constant 1 : index
    %c0_163 = arith.constant 0 : index
    %163 = vector.load %arg3[%c0_160, %c0_161, %c1_162, %c0_163] : memref<1x3x3x128xf32, #tpu.memory_space<vmem>>, vector<1x1x1x128xf32>
    %164 = vector.shape_cast %163 : vector<1x1x1x128xf32> to vector<128xf32>
    %165 = vector.shape_cast %164 : vector<128xf32> to vector<1x128xf32>
    %166 = vector.broadcast %165 : vector<1x128xf32> to vector<7x128xf32>
    %167 = arith.mulf %162, %166 : vector<7x128xf32>
    %168 = arith.addf %160, %167 : vector<7x128xf32>
    %c0_164 = arith.constant 0 : index
    %c0_165 = arith.constant 0 : index
    %c0_166 = arith.constant 0 : index
    %c512 = arith.constant 512 : index
    %169 = vector.load %arg2[%c0_164, %c0_165, %c0_166, %c512] : memref<1x1x9x1152xf32, #tpu.memory_space<vmem>>, vector<1x1x7x128xf32>
    %170 = vector.shape_cast %169 : vector<1x1x7x128xf32> to vector<7x128xf32>
    %c0_167 = arith.constant 0 : index
    %c0_168 = arith.constant 0 : index
    %c2_169 = arith.constant 2 : index
    %c0_170 = arith.constant 0 : index
    %171 = vector.load %arg3[%c0_167, %c0_168, %c2_169, %c0_170] : memref<1x3x3x128xf32, #tpu.memory_space<vmem>>, vector<1x1x1x128xf32>
    %172 = vector.shape_cast %171 : vector<1x1x1x128xf32> to vector<128xf32>
    %173 = vector.shape_cast %172 : vector<128xf32> to vector<1x128xf32>
    %174 = vector.broadcast %173 : vector<1x128xf32> to vector<7x128xf32>
    %175 = arith.mulf %170, %174 : vector<7x128xf32>
    %176 = arith.addf %168, %175 : vector<7x128xf32>
    %c0_171 = arith.constant 0 : index
    %c0_172 = arith.constant 0 : index
    %c1_173 = arith.constant 1 : index
    %c256_174 = arith.constant 256 : index
    %177 = vector.load %arg2[%c0_171, %c0_172, %c1_173, %c256_174] : memref<1x1x9x1152xf32, #tpu.memory_space<vmem>>, vector<1x1x7x128xf32>
    %178 = vector.shape_cast %177 : vector<1x1x7x128xf32> to vector<7x128xf32>
    %c0_175 = arith.constant 0 : index
    %c1_176 = arith.constant 1 : index
    %c0_177 = arith.constant 0 : index
    %c0_178 = arith.constant 0 : index
    %179 = vector.load %arg3[%c0_175, %c1_176, %c0_177, %c0_178] : memref<1x3x3x128xf32, #tpu.memory_space<vmem>>, vector<1x1x1x128xf32>
    %180 = vector.shape_cast %179 : vector<1x1x1x128xf32> to vector<128xf32>
    %181 = vector.shape_cast %180 : vector<128xf32> to vector<1x128xf32>
    %182 = vector.broadcast %181 : vector<1x128xf32> to vector<7x128xf32>
    %183 = arith.mulf %178, %182 : vector<7x128xf32>
    %184 = arith.addf %176, %183 : vector<7x128xf32>
    %c0_179 = arith.constant 0 : index
    %c0_180 = arith.constant 0 : index
    %c1_181 = arith.constant 1 : index
    %c384_182 = arith.constant 384 : index
    %185 = vector.load %arg2[%c0_179, %c0_180, %c1_181, %c384_182] : memref<1x1x9x1152xf32, #tpu.memory_space<vmem>>, vector<1x1x7x128xf32>
    %186 = vector.shape_cast %185 : vector<1x1x7x128xf32> to vector<7x128xf32>
    %c0_183 = arith.constant 0 : index
    %c1_184 = arith.constant 1 : index
    %c1_185 = arith.constant 1 : index
    %c0_186 = arith.constant 0 : index
    %187 = vector.load %arg3[%c0_183, %c1_184, %c1_185, %c0_186] : memref<1x3x3x128xf32, #tpu.memory_space<vmem>>, vector<1x1x1x128xf32>
    %188 = vector.shape_cast %187 : vector<1x1x1x128xf32> to vector<128xf32>
    %189 = vector.shape_cast %188 : vector<128xf32> to vector<1x128xf32>
    %190 = vector.broadcast %189 : vector<1x128xf32> to vector<7x128xf32>
    %191 = arith.mulf %186, %190 : vector<7x128xf32>
    %192 = arith.addf %184, %191 : vector<7x128xf32>
    %c0_187 = arith.constant 0 : index
    %c0_188 = arith.constant 0 : index
    %c1_189 = arith.constant 1 : index
    %c512_190 = arith.constant 512 : index
    %193 = vector.load %arg2[%c0_187, %c0_188, %c1_189, %c512_190] : memref<1x1x9x1152xf32, #tpu.memory_space<vmem>>, vector<1x1x7x128xf32>
    %194 = vector.shape_cast %193 : vector<1x1x7x128xf32> to vector<7x128xf32>
    %c0_191 = arith.constant 0 : index
    %c1_192 = arith.constant 1 : index
    %c2_193 = arith.constant 2 : index
    %c0_194 = arith.constant 0 : index
    %195 = vector.load %arg3[%c0_191, %c1_192, %c2_193, %c0_194] : memref<1x3x3x128xf32, #tpu.memory_space<vmem>>, vector<1x1x1x128xf32>
    %196 = vector.shape_cast %195 : vector<1x1x1x128xf32> to vector<128xf32>
    %197 = vector.shape_cast %196 : vector<128xf32> to vector<1x128xf32>
    %198 = vector.broadcast %197 : vector<1x128xf32> to vector<7x128xf32>
    %199 = arith.mulf %194, %198 : vector<7x128xf32>
    %200 = arith.addf %192, %199 : vector<7x128xf32>
    %c0_195 = arith.constant 0 : index
    %c0_196 = arith.constant 0 : index
    %c2_197 = arith.constant 2 : index
    %c256_198 = arith.constant 256 : index
    %201 = vector.load %arg2[%c0_195, %c0_196, %c2_197, %c256_198] : memref<1x1x9x1152xf32, #tpu.memory_space<vmem>>, vector<1x1x7x128xf32>
    %202 = vector.shape_cast %201 : vector<1x1x7x128xf32> to vector<7x128xf32>
    %c0_199 = arith.constant 0 : index
    %c2_200 = arith.constant 2 : index
    %c0_201 = arith.constant 0 : index
    %c0_202 = arith.constant 0 : index
    %203 = vector.load %arg3[%c0_199, %c2_200, %c0_201, %c0_202] : memref<1x3x3x128xf32, #tpu.memory_space<vmem>>, vector<1x1x1x128xf32>
    %204 = vector.shape_cast %203 : vector<1x1x1x128xf32> to vector<128xf32>
    %205 = vector.shape_cast %204 : vector<128xf32> to vector<1x128xf32>
    %206 = vector.broadcast %205 : vector<1x128xf32> to vector<7x128xf32>
    %207 = arith.mulf %202, %206 : vector<7x128xf32>
    %208 = arith.addf %200, %207 : vector<7x128xf32>
    %c0_203 = arith.constant 0 : index
    %c0_204 = arith.constant 0 : index
    %c2_205 = arith.constant 2 : index
    %c384_206 = arith.constant 384 : index
    %209 = vector.load %arg2[%c0_203, %c0_204, %c2_205, %c384_206] : memref<1x1x9x1152xf32, #tpu.memory_space<vmem>>, vector<1x1x7x128xf32>
    %210 = vector.shape_cast %209 : vector<1x1x7x128xf32> to vector<7x128xf32>
    %c0_207 = arith.constant 0 : index
    %c2_208 = arith.constant 2 : index
    %c1_209 = arith.constant 1 : index
    %c0_210 = arith.constant 0 : index
    %211 = vector.load %arg3[%c0_207, %c2_208, %c1_209, %c0_210] : memref<1x3x3x128xf32, #tpu.memory_space<vmem>>, vector<1x1x1x128xf32>
    %212 = vector.shape_cast %211 : vector<1x1x1x128xf32> to vector<128xf32>
    %213 = vector.shape_cast %212 : vector<128xf32> to vector<1x128xf32>
    %214 = vector.broadcast %213 : vector<1x128xf32> to vector<7x128xf32>
    %215 = arith.mulf %210, %214 : vector<7x128xf32>
    %216 = arith.addf %208, %215 : vector<7x128xf32>
    %c0_211 = arith.constant 0 : index
    %c0_212 = arith.constant 0 : index
    %c2_213 = arith.constant 2 : index
    %c512_214 = arith.constant 512 : index
    %217 = vector.load %arg2[%c0_211, %c0_212, %c2_213, %c512_214] : memref<1x1x9x1152xf32, #tpu.memory_space<vmem>>, vector<1x1x7x128xf32>
    %218 = vector.shape_cast %217 : vector<1x1x7x128xf32> to vector<7x128xf32>
    %c0_215 = arith.constant 0 : index
    %c2_216 = arith.constant 2 : index
    %c2_217 = arith.constant 2 : index
    %c0_218 = arith.constant 0 : index
    %219 = vector.load %arg3[%c0_215, %c2_216, %c2_217, %c0_218] : memref<1x3x3x128xf32, #tpu.memory_space<vmem>>, vector<1x1x1x128xf32>
    %220 = vector.shape_cast %219 : vector<1x1x1x128xf32> to vector<128xf32>
    %221 = vector.shape_cast %220 : vector<128xf32> to vector<1x128xf32>
    %222 = vector.broadcast %221 : vector<1x128xf32> to vector<7x128xf32>
    %223 = arith.mulf %218, %222 : vector<7x128xf32>
    %224 = arith.addf %216, %223 : vector<7x128xf32>
    %c0_219 = arith.constant 0 : index
    %c0_220 = arith.constant 0 : index
    %c0_221 = arith.constant 0 : index
    %c256_222 = arith.constant 256 : index
    %225 = vector.load %arg4[%c0_219, %c0_220, %c0_221, %c256_222] : memref<1x1x7x896xf32, #tpu.memory_space<vmem>>, vector<1x1x7x128xf32>
    %226 = vector.shape_cast %225 : vector<1x1x7x128xf32> to vector<7x128xf32>
    %227 = vector.shape_cast %224 : vector<7x128xf32> to vector<1x1x7x128xf32>
    tpu.vector_store %arg4[%c0_219, %c0_220, %c0_221, %c256_222], %227 {strides = array<i32>} : memref<1x1x7x896xf32, #tpu.memory_space<vmem>>, vector<1x1x7x128xf32>,
    %cst_223 = arith.constant 0.000000e+00 : f32
    %228 = vector.broadcast %cst_223 : f32 to vector<7x128xf32>
    %c0_224 = arith.constant 0 : index
    %c0_225 = arith.constant 0 : index
    %c0_226 = arith.constant 0 : index
    %c384_227 = arith.constant 384 : index
    %229 = vector.load %arg2[%c0_224, %c0_225, %c0_226, %c384_227] : memref<1x1x9x1152xf32, #tpu.memory_space<vmem>>, vector<1x1x7x128xf32>
    %230 = vector.shape_cast %229 : vector<1x1x7x128xf32> to vector<7x128xf32>
    %c0_228 = arith.constant 0 : index
    %c0_229 = arith.constant 0 : index
    %c0_230 = arith.constant 0 : index
    %c0_231 = arith.constant 0 : index
    %231 = vector.load %arg3[%c0_228, %c0_229, %c0_230, %c0_231] : memref<1x3x3x128xf32, #tpu.memory_space<vmem>>, vector<1x1x1x128xf32>
    %232 = vector.shape_cast %231 : vector<1x1x1x128xf32> to vector<128xf32>
    %233 = vector.shape_cast %232 : vector<128xf32> to vector<1x128xf32>
    %234 = vector.broadcast %233 : vector<1x128xf32> to vector<7x128xf32>
    %235 = arith.mulf %230, %234 : vector<7x128xf32>
    %236 = arith.addf %228, %235 : vector<7x128xf32>
    %c0_232 = arith.constant 0 : index
    %c0_233 = arith.constant 0 : index
    %c0_234 = arith.constant 0 : index
    %c512_235 = arith.constant 512 : index
    %237 = vector.load %arg2[%c0_232, %c0_233, %c0_234, %c512_235] : memref<1x1x9x1152xf32, #tpu.memory_space<vmem>>, vector<1x1x7x128xf32>
    %238 = vector.shape_cast %237 : vector<1x1x7x128xf32> to vector<7x128xf32>
    %c0_236 = arith.constant 0 : index
    %c0_237 = arith.constant 0 : index
    %c1_238 = arith.constant 1 : index
    %c0_239 = arith.constant 0 : index
    %239 = vector.load %arg3[%c0_236, %c0_237, %c1_238, %c0_239] : memref<1x3x3x128xf32, #tpu.memory_space<vmem>>, vector<1x1x1x128xf32>
    %240 = vector.shape_cast %239 : vector<1x1x1x128xf32> to vector<128xf32>
    %241 = vector.shape_cast %240 : vector<128xf32> to vector<1x128xf32>
    %242 = vector.broadcast %241 : vector<1x128xf32> to vector<7x128xf32>
    %243 = arith.mulf %238, %242 : vector<7x128xf32>
    %244 = arith.addf %236, %243 : vector<7x128xf32>
    %c0_240 = arith.constant 0 : index
    %c0_241 = arith.constant 0 : index
    %c0_242 = arith.constant 0 : index
    %c640 = arith.constant 640 : index
    %245 = vector.load %arg2[%c0_240, %c0_241, %c0_242, %c640] : memref<1x1x9x1152xf32, #tpu.memory_space<vmem>>, vector<1x1x7x128xf32>
    %246 = vector.shape_cast %245 : vector<1x1x7x128xf32> to vector<7x128xf32>
    %c0_243 = arith.constant 0 : index
    %c0_244 = arith.constant 0 : index
    %c2_245 = arith.constant 2 : index
    %c0_246 = arith.constant 0 : index
    %247 = vector.load %arg3[%c0_243, %c0_244, %c2_245, %c0_246] : memref<1x3x3x128xf32, #tpu.memory_space<vmem>>, vector<1x1x1x128xf32>
    %248 = vector.shape_cast %247 : vector<1x1x1x128xf32> to vector<128xf32>
    %249 = vector.shape_cast %248 : vector<128xf32> to vector<1x128xf32>
    %250 = vector.broadcast %249 : vector<1x128xf32> to vector<7x128xf32>
    %251 = arith.mulf %246, %250 : vector<7x128xf32>
    %252 = arith.addf %244, %251 : vector<7x128xf32>
    %c0_247 = arith.constant 0 : index
    %c0_248 = arith.constant 0 : index
    %c1_249 = arith.constant 1 : index
    %c384_250 = arith.constant 384 : index
    %253 = vector.load %arg2[%c0_247, %c0_248, %c1_249, %c384_250] : memref<1x1x9x1152xf32, #tpu.memory_space<vmem>>, vector<1x1x7x128xf32>
    %254 = vector.shape_cast %253 : vector<1x1x7x128xf32> to vector<7x128xf32>
    %c0_251 = arith.constant 0 : index
    %c1_252 = arith.constant 1 : index
    %c0_253 = arith.constant 0 : index
    %c0_254 = arith.constant 0 : index
    %255 = vector.load %arg3[%c0_251, %c1_252, %c0_253, %c0_254] : memref<1x3x3x128xf32, #tpu.memory_space<vmem>>, vector<1x1x1x128xf32>
    %256 = vector.shape_cast %255 : vector<1x1x1x128xf32> to vector<128xf32>
    %257 = vector.shape_cast %256 : vector<128xf32> to vector<1x128xf32>
    %258 = vector.broadcast %257 : vector<1x128xf32> to vector<7x128xf32>
    %259 = arith.mulf %254, %258 : vector<7x128xf32>
    %260 = arith.addf %252, %259 : vector<7x128xf32>
    %c0_255 = arith.constant 0 : index
    %c0_256 = arith.constant 0 : index
    %c1_257 = arith.constant 1 : index
    %c512_258 = arith.constant 512 : index
    %261 = vector.load %arg2[%c0_255, %c0_256, %c1_257, %c512_258] : memref<1x1x9x1152xf32, #tpu.memory_space<vmem>>, vector<1x1x7x128xf32>
    %262 = vector.shape_cast %261 : vector<1x1x7x128xf32> to vector<7x128xf32>
    %c0_259 = arith.constant 0 : index
    %c1_260 = arith.constant 1 : index
    %c1_261 = arith.constant 1 : index
    %c0_262 = arith.constant 0 : index
    %263 = vector.load %arg3[%c0_259, %c1_260, %c1_261, %c0_262] : memref<1x3x3x128xf32, #tpu.memory_space<vmem>>, vector<1x1x1x128xf32>
    %264 = vector.shape_cast %263 : vector<1x1x1x128xf32> to vector<128xf32>
    %265 = vector.shape_cast %264 : vector<128xf32> to vector<1x128xf32>
    %266 = vector.broadcast %265 : vector<1x128xf32> to vector<7x128xf32>
    %267 = arith.mulf %262, %266 : vector<7x128xf32>
    %268 = arith.addf %260, %267 : vector<7x128xf32>
    %c0_263 = arith.constant 0 : index
    %c0_264 = arith.constant 0 : index
    %c1_265 = arith.constant 1 : index
    %c640_266 = arith.constant 640 : index
    %269 = vector.load %arg2[%c0_263, %c0_264, %c1_265, %c640_266] : memref<1x1x9x1152xf32, #tpu.memory_space<vmem>>, vector<1x1x7x128xf32>
    %270 = vector.shape_cast %269 : vector<1x1x7x128xf32> to vector<7x128xf32>
    %c0_267 = arith.constant 0 : index
    %c1_268 = arith.constant 1 : index
    %c2_269 = arith.constant 2 : index
    %c0_270 = arith.constant 0 : index
    %271 = vector.load %arg3[%c0_267, %c1_268, %c2_269, %c0_270] : memref<1x3x3x128xf32, #tpu.memory_space<vmem>>, vector<1x1x1x128xf32>
    %272 = vector.shape_cast %271 : vector<1x1x1x128xf32> to vector<128xf32>
    %273 = vector.shape_cast %272 : vector<128xf32> to vector<1x128xf32>
    %274 = vector.broadcast %273 : vector<1x128xf32> to vector<7x128xf32>
    %275 = arith.mulf %270, %274 : vector<7x128xf32>
    %276 = arith.addf %268, %275 : vector<7x128xf32>
    %c0_271 = arith.constant 0 : index
    %c0_272 = arith.constant 0 : index
    %c2_273 = arith.constant 2 : index
    %c384_274 = arith.constant 384 : index
    %277 = vector.load %arg2[%c0_271, %c0_272, %c2_273, %c384_274] : memref<1x1x9x1152xf32, #tpu.memory_space<vmem>>, vector<1x1x7x128xf32>
    %278 = vector.shape_cast %277 : vector<1x1x7x128xf32> to vector<7x128xf32>
    %c0_275 = arith.constant 0 : index
    %c2_276 = arith.constant 2 : index
    %c0_277 = arith.constant 0 : index
    %c0_278 = arith.constant 0 : index
    %279 = vector.load %arg3[%c0_275, %c2_276, %c0_277, %c0_278] : memref<1x3x3x128xf32, #tpu.memory_space<vmem>>, vector<1x1x1x128xf32>
    %280 = vector.shape_cast %279 : vector<1x1x1x128xf32> to vector<128xf32>
    %281 = vector.shape_cast %280 : vector<128xf32> to vector<1x128xf32>
    %282 = vector.broadcast %281 : vector<1x128xf32> to vector<7x128xf32>
    %283 = arith.mulf %278, %282 : vector<7x128xf32>
    %284 = arith.addf %276, %283 : vector<7x128xf32>
    %c0_279 = arith.constant 0 : index
    %c0_280 = arith.constant 0 : index
    %c2_281 = arith.constant 2 : index
    %c512_282 = arith.constant 512 : index
    %285 = vector.load %arg2[%c0_279, %c0_280, %c2_281, %c512_282] : memref<1x1x9x1152xf32, #tpu.memory_space<vmem>>, vector<1x1x7x128xf32>
    %286 = vector.shape_cast %285 : vector<1x1x7x128xf32> to vector<7x128xf32>
    %c0_283 = arith.constant 0 : index
    %c2_284 = arith.constant 2 : index
    %c1_285 = arith.constant 1 : index
    %c0_286 = arith.constant 0 : index
    %287 = vector.load %arg3[%c0_283, %c2_284, %c1_285, %c0_286] : memref<1x3x3x128xf32, #tpu.memory_space<vmem>>, vector<1x1x1x128xf32>
    %288 = vector.shape_cast %287 : vector<1x1x1x128xf32> to vector<128xf32>
    %289 = vector.shape_cast %288 : vector<128xf32> to vector<1x128xf32>
    %290 = vector.broadcast %289 : vector<1x128xf32> to vector<7x128xf32>
    %291 = arith.mulf %286, %290 : vector<7x128xf32>
    %292 = arith.addf %284, %291 : vector<7x128xf32>
    %c0_287 = arith.constant 0 : index
    %c0_288 = arith.constant 0 : index
    %c2_289 = arith.constant 2 : index
    %c640_290 = arith.constant 640 : index
    %293 = vector.load %arg2[%c0_287, %c0_288, %c2_289, %c640_290] : memref<1x1x9x1152xf32, #tpu.memory_space<vmem>>, vector<1x1x7x128xf32>
    %294 = vector.shape_cast %293 : vector<1x1x7x128xf32> to vector<7x128xf32>
    %c0_291 = arith.constant 0 : index
    %c2_292 = arith.constant 2 : index
    %c2_293 = arith.constant 2 : index
    %c0_294 = arith.constant 0 : index
    %295 = vector.load %arg3[%c0_291, %c2_292, %c2_293, %c0_294] : memref<1x3x3x128xf32, #tpu.memory_space<vmem>>, vector<1x1x1x128xf32>
    %296 = vector.shape_cast %295 : vector<1x1x1x128xf32> to vector<128xf32>
    %297 = vector.shape_cast %296 : vector<128xf32> to vector<1x128xf32>
    %298 = vector.broadcast %297 : vector<1x128xf32> to vector<7x128xf32>
    %299 = arith.mulf %294, %298 : vector<7x128xf32>
    %300 = arith.addf %292, %299 : vector<7x128xf32>
    %c0_295 = arith.constant 0 : index
    %c0_296 = arith.constant 0 : index
    %c0_297 = arith.constant 0 : index
    %c384_298 = arith.constant 384 : index
    %301 = vector.load %arg4[%c0_295, %c0_296, %c0_297, %c384_298] : memref<1x1x7x896xf32, #tpu.memory_space<vmem>>, vector<1x1x7x128xf32>
    %302 = vector.shape_cast %301 : vector<1x1x7x128xf32> to vector<7x128xf32>
    %303 = vector.shape_cast %300 : vector<7x128xf32> to vector<1x1x7x128xf32>
    tpu.vector_store %arg4[%c0_295, %c0_296, %c0_297, %c384_298], %303 {strides = array<i32>} : memref<1x1x7x896xf32, #tpu.memory_space<vmem>>, vector<1x1x7x128xf32>,
    %cst_299 = arith.constant 0.000000e+00 : f32
    %304 = vector.broadcast %cst_299 : f32 to vector<7x128xf32>
    %c0_300 = arith.constant 0 : index
    %c0_301 = arith.constant 0 : index
    %c0_302 = arith.constant 0 : index
    %c512_303 = arith.constant 512 : index
    %305 = vector.load %arg2[%c0_300, %c0_301, %c0_302, %c512_303] : memref<1x1x9x1152xf32, #tpu.memory_space<vmem>>, vector<1x1x7x128xf32>
    %306 = vector.shape_cast %305 : vector<1x1x7x128xf32> to vector<7x128xf32>
    %c0_304 = arith.constant 0 : index
    %c0_305 = arith.constant 0 : index
    %c0_306 = arith.constant 0 : index
    %c0_307 = arith.constant 0 : index
    %307 = vector.load %arg3[%c0_304, %c0_305, %c0_306, %c0_307] : memref<1x3x3x128xf32, #tpu.memory_space<vmem>>, vector<1x1x1x128xf32>
    %308 = vector.shape_cast %307 : vector<1x1x1x128xf32> to vector<128xf32>
    %309 = vector.shape_cast %308 : vector<128xf32> to vector<1x128xf32>
    %310 = vector.broadcast %309 : vector<1x128xf32> to vector<7x128xf32>
    %311 = arith.mulf %306, %310 : vector<7x128xf32>
    %312 = arith.addf %304, %311 : vector<7x128xf32>
    %c0_308 = arith.constant 0 : index
    %c0_309 = arith.constant 0 : index
    %c0_310 = arith.constant 0 : index
    %c640_311 = arith.constant 640 : index
    %313 = vector.load %arg2[%c0_308, %c0_309, %c0_310, %c640_311] : memref<1x1x9x1152xf32, #tpu.memory_space<vmem>>, vector<1x1x7x128xf32>
    %314 = vector.shape_cast %313 : vector<1x1x7x128xf32> to vector<7x128xf32>
    %c0_312 = arith.constant 0 : index
    %c0_313 = arith.constant 0 : index
    %c1_314 = arith.constant 1 : index
    %c0_315 = arith.constant 0 : index
    %315 = vector.load %arg3[%c0_312, %c0_313, %c1_314, %c0_315] : memref<1x3x3x128xf32, #tpu.memory_space<vmem>>, vector<1x1x1x128xf32>
    %316 = vector.shape_cast %315 : vector<1x1x1x128xf32> to vector<128xf32>
    %317 = vector.shape_cast %316 : vector<128xf32> to vector<1x128xf32>
    %318 = vector.broadcast %317 : vector<1x128xf32> to vector<7x128xf32>
    %319 = arith.mulf %314, %318 : vector<7x128xf32>
    %320 = arith.addf %312, %319 : vector<7x128xf32>
    %c0_316 = arith.constant 0 : index
    %c0_317 = arith.constant 0 : index
    %c0_318 = arith.constant 0 : index
    %c768 = arith.constant 768 : index
    %321 = vector.load %arg2[%c0_316, %c0_317, %c0_318, %c768] : memref<1x1x9x1152xf32, #tpu.memory_space<vmem>>, vector<1x1x7x128xf32>
    %322 = vector.shape_cast %321 : vector<1x1x7x128xf32> to vector<7x128xf32>
    %c0_319 = arith.constant 0 : index
    %c0_320 = arith.constant 0 : index
    %c2_321 = arith.constant 2 : index
    %c0_322 = arith.constant 0 : index
    %323 = vector.load %arg3[%c0_319, %c0_320, %c2_321, %c0_322] : memref<1x3x3x128xf32, #tpu.memory_space<vmem>>, vector<1x1x1x128xf32>
    %324 = vector.shape_cast %323 : vector<1x1x1x128xf32> to vector<128xf32>
    %325 = vector.shape_cast %324 : vector<128xf32> to vector<1x128xf32>
    %326 = vector.broadcast %325 : vector<1x128xf32> to vector<7x128xf32>
    %327 = arith.mulf %322, %326 : vector<7x128xf32>
    %328 = arith.addf %320, %327 : vector<7x128xf32>
    %c0_323 = arith.constant 0 : index
    %c0_324 = arith.constant 0 : index
    %c1_325 = arith.constant 1 : index
    %c512_326 = arith.constant 512 : index
    %329 = vector.load %arg2[%c0_323, %c0_324, %c1_325, %c512_326] : memref<1x1x9x1152xf32, #tpu.memory_space<vmem>>, vector<1x1x7x128xf32>
    %330 = vector.shape_cast %329 : vector<1x1x7x128xf32> to vector<7x128xf32>
    %c0_327 = arith.constant 0 : index
    %c1_328 = arith.constant 1 : index
    %c0_329 = arith.constant 0 : index
    %c0_330 = arith.constant 0 : index
    %331 = vector.load %arg3[%c0_327, %c1_328, %c0_329, %c0_330] : memref<1x3x3x128xf32, #tpu.memory_space<vmem>>, vector<1x1x1x128xf32>
    %332 = vector.shape_cast %331 : vector<1x1x1x128xf32> to vector<128xf32>
    %333 = vector.shape_cast %332 : vector<128xf32> to vector<1x128xf32>
    %334 = vector.broadcast %333 : vector<1x128xf32> to vector<7x128xf32>
    %335 = arith.mulf %330, %334 : vector<7x128xf32>
    %336 = arith.addf %328, %335 : vector<7x128xf32>
    %c0_331 = arith.constant 0 : index
    %c0_332 = arith.constant 0 : index
    %c1_333 = arith.constant 1 : index
    %c640_334 = arith.constant 640 : index
    %337 = vector.load %arg2[%c0_331, %c0_332, %c1_333, %c640_334] : memref<1x1x9x1152xf32, #tpu.memory_space<vmem>>, vector<1x1x7x128xf32>
    %338 = vector.shape_cast %337 : vector<1x1x7x128xf32> to vector<7x128xf32>
    %c0_335 = arith.constant 0 : index
    %c1_336 = arith.constant 1 : index
    %c1_337 = arith.constant 1 : index
    %c0_338 = arith.constant 0 : index
    %339 = vector.load %arg3[%c0_335, %c1_336, %c1_337, %c0_338] : memref<1x3x3x128xf32, #tpu.memory_space<vmem>>, vector<1x1x1x128xf32>
    %340 = vector.shape_cast %339 : vector<1x1x1x128xf32> to vector<128xf32>
    %341 = vector.shape_cast %340 : vector<128xf32> to vector<1x128xf32>
    %342 = vector.broadcast %341 : vector<1x128xf32> to vector<7x128xf32>
    %343 = arith.mulf %338, %342 : vector<7x128xf32>
    %344 = arith.addf %336, %343 : vector<7x128xf32>
    %c0_339 = arith.constant 0 : index
    %c0_340 = arith.constant 0 : index
    %c1_341 = arith.constant 1 : index
    %c768_342 = arith.constant 768 : index
    %345 = vector.load %arg2[%c0_339, %c0_340, %c1_341, %c768_342] : memref<1x1x9x1152xf32, #tpu.memory_space<vmem>>, vector<1x1x7x128xf32>
    %346 = vector.shape_cast %345 : vector<1x1x7x128xf32> to vector<7x128xf32>
    %c0_343 = arith.constant 0 : index
    %c1_344 = arith.constant 1 : index
    %c2_345 = arith.constant 2 : index
    %c0_346 = arith.constant 0 : index
    %347 = vector.load %arg3[%c0_343, %c1_344, %c2_345, %c0_346] : memref<1x3x3x128xf32, #tpu.memory_space<vmem>>, vector<1x1x1x128xf32>
    %348 = vector.shape_cast %347 : vector<1x1x1x128xf32> to vector<128xf32>
    %349 = vector.shape_cast %348 : vector<128xf32> to vector<1x128xf32>
    %350 = vector.broadcast %349 : vector<1x128xf32> to vector<7x128xf32>
    %351 = arith.mulf %346, %350 : vector<7x128xf32>
    %352 = arith.addf %344, %351 : vector<7x128xf32>
    %c0_347 = arith.constant 0 : index
    %c0_348 = arith.constant 0 : index
    %c2_349 = arith.constant 2 : index
    %c512_350 = arith.constant 512 : index
    %353 = vector.load %arg2[%c0_347, %c0_348, %c2_349, %c512_350] : memref<1x1x9x1152xf32, #tpu.memory_space<vmem>>, vector<1x1x7x128xf32>
    %354 = vector.shape_cast %353 : vector<1x1x7x128xf32> to vector<7x128xf32>
    %c0_351 = arith.constant 0 : index
    %c2_352 = arith.constant 2 : index
    %c0_353 = arith.constant 0 : index
    %c0_354 = arith.constant 0 : index
    %355 = vector.load %arg3[%c0_351, %c2_352, %c0_353, %c0_354] : memref<1x3x3x128xf32, #tpu.memory_space<vmem>>, vector<1x1x1x128xf32>
    %356 = vector.shape_cast %355 : vector<1x1x1x128xf32> to vector<128xf32>
    %357 = vector.shape_cast %356 : vector<128xf32> to vector<1x128xf32>
    %358 = vector.broadcast %357 : vector<1x128xf32> to vector<7x128xf32>
    %359 = arith.mulf %354, %358 : vector<7x128xf32>
    %360 = arith.addf %352, %359 : vector<7x128xf32>
    %c0_355 = arith.constant 0 : index
    %c0_356 = arith.constant 0 : index
    %c2_357 = arith.constant 2 : index
    %c640_358 = arith.constant 640 : index
    %361 = vector.load %arg2[%c0_355, %c0_356, %c2_357, %c640_358] : memref<1x1x9x1152xf32, #tpu.memory_space<vmem>>, vector<1x1x7x128xf32>
    %362 = vector.shape_cast %361 : vector<1x1x7x128xf32> to vector<7x128xf32>
    %c0_359 = arith.constant 0 : index
    %c2_360 = arith.constant 2 : index
    %c1_361 = arith.constant 1 : index
    %c0_362 = arith.constant 0 : index
    %363 = vector.load %arg3[%c0_359, %c2_360, %c1_361, %c0_362] : memref<1x3x3x128xf32, #tpu.memory_space<vmem>>, vector<1x1x1x128xf32>
    %364 = vector.shape_cast %363 : vector<1x1x1x128xf32> to vector<128xf32>
    %365 = vector.shape_cast %364 : vector<128xf32> to vector<1x128xf32>
    %366 = vector.broadcast %365 : vector<1x128xf32> to vector<7x128xf32>
    %367 = arith.mulf %362, %366 : vector<7x128xf32>
    %368 = arith.addf %360, %367 : vector<7x128xf32>
    %c0_363 = arith.constant 0 : index
    %c0_364 = arith.constant 0 : index
    %c2_365 = arith.constant 2 : index
    %c768_366 = arith.constant 768 : index
    %369 = vector.load %arg2[%c0_363, %c0_364, %c2_365, %c768_366] : memref<1x1x9x1152xf32, #tpu.memory_space<vmem>>, vector<1x1x7x128xf32>
    %370 = vector.shape_cast %369 : vector<1x1x7x128xf32> to vector<7x128xf32>
    %c0_367 = arith.constant 0 : index
    %c2_368 = arith.constant 2 : index
    %c2_369 = arith.constant 2 : index
    %c0_370 = arith.constant 0 : index
    %371 = vector.load %arg3[%c0_367, %c2_368, %c2_369, %c0_370] : memref<1x3x3x128xf32, #tpu.memory_space<vmem>>, vector<1x1x1x128xf32>
    %372 = vector.shape_cast %371 : vector<1x1x1x128xf32> to vector<128xf32>
    %373 = vector.shape_cast %372 : vector<128xf32> to vector<1x128xf32>
    %374 = vector.broadcast %373 : vector<1x128xf32> to vector<7x128xf32>
    %375 = arith.mulf %370, %374 : vector<7x128xf32>
    %376 = arith.addf %368, %375 : vector<7x128xf32>
    %c0_371 = arith.constant 0 : index
    %c0_372 = arith.constant 0 : index
    %c0_373 = arith.constant 0 : index
    %c512_374 = arith.constant 512 : index
    %377 = vector.load %arg4[%c0_371, %c0_372, %c0_373, %c512_374] : memref<1x1x7x896xf32, #tpu.memory_space<vmem>>, vector<1x1x7x128xf32>
    %378 = vector.shape_cast %377 : vector<1x1x7x128xf32> to vector<7x128xf32>
    %379 = vector.shape_cast %376 : vector<7x128xf32> to vector<1x1x7x128xf32>
    tpu.vector_store %arg4[%c0_371, %c0_372, %c0_373, %c512_374], %379 {strides = array<i32>} : memref<1x1x7x896xf32, #tpu.memory_space<vmem>>, vector<1x1x7x128xf32>,
    %cst_375 = arith.constant 0.000000e+00 : f32
    %380 = vector.broadcast %cst_375 : f32 to vector<7x128xf32>
    %c0_376 = arith.constant 0 : index
    %c0_377 = arith.constant 0 : index
    %c0_378 = arith.constant 0 : index
    %c640_379 = arith.constant 640 : index
    %381 = vector.load %arg2[%c0_376, %c0_377, %c0_378, %c640_379] : memref<1x1x9x1152xf32, #tpu.memory_space<vmem>>, vector<1x1x7x128xf32>
    %382 = vector.shape_cast %381 : vector<1x1x7x128xf32> to vector<7x128xf32>
    %c0_380 = arith.constant 0 : index
    %c0_381 = arith.constant 0 : index
    %c0_382 = arith.constant 0 : index
    %c0_383 = arith.constant 0 : index
    %383 = vector.load %arg3[%c0_380, %c0_381, %c0_382, %c0_383] : memref<1x3x3x128xf32, #tpu.memory_space<vmem>>, vector<1x1x1x128xf32>
    %384 = vector.shape_cast %383 : vector<1x1x1x128xf32> to vector<128xf32>
    %385 = vector.shape_cast %384 : vector<128xf32> to vector<1x128xf32>
    %386 = vector.broadcast %385 : vector<1x128xf32> to vector<7x128xf32>
    %387 = arith.mulf %382, %386 : vector<7x128xf32>
    %388 = arith.addf %380, %387 : vector<7x128xf32>
    %c0_384 = arith.constant 0 : index
    %c0_385 = arith.constant 0 : index
    %c0_386 = arith.constant 0 : index
    %c768_387 = arith.constant 768 : index
    %389 = vector.load %arg2[%c0_384, %c0_385, %c0_386, %c768_387] : memref<1x1x9x1152xf32, #tpu.memory_space<vmem>>, vector<1x1x7x128xf32>
    %390 = vector.shape_cast %389 : vector<1x1x7x128xf32> to vector<7x128xf32>
    %c0_388 = arith.constant 0 : index
    %c0_389 = arith.constant 0 : index
    %c1_390 = arith.constant 1 : index
    %c0_391 = arith.constant 0 : index
    %391 = vector.load %arg3[%c0_388, %c0_389, %c1_390, %c0_391] : memref<1x3x3x128xf32, #tpu.memory_space<vmem>>, vector<1x1x1x128xf32>
    %392 = vector.shape_cast %391 : vector<1x1x1x128xf32> to vector<128xf32>
    %393 = vector.shape_cast %392 : vector<128xf32> to vector<1x128xf32>
    %394 = vector.broadcast %393 : vector<1x128xf32> to vector<7x128xf32>
    %395 = arith.mulf %390, %394 : vector<7x128xf32>
    %396 = arith.addf %388, %395 : vector<7x128xf32>
    %c0_392 = arith.constant 0 : index
    %c0_393 = arith.constant 0 : index
    %c0_394 = arith.constant 0 : index
    %c896 = arith.constant 896 : index
    %397 = vector.load %arg2[%c0_392, %c0_393, %c0_394, %c896] : memref<1x1x9x1152xf32, #tpu.memory_space<vmem>>, vector<1x1x7x128xf32>
    %398 = vector.shape_cast %397 : vector<1x1x7x128xf32> to vector<7x128xf32>
    %c0_395 = arith.constant 0 : index
    %c0_396 = arith.constant 0 : index
    %c2_397 = arith.constant 2 : index
    %c0_398 = arith.constant 0 : index
    %399 = vector.load %arg3[%c0_395, %c0_396, %c2_397, %c0_398] : memref<1x3x3x128xf32, #tpu.memory_space<vmem>>, vector<1x1x1x128xf32>
    %400 = vector.shape_cast %399 : vector<1x1x1x128xf32> to vector<128xf32>
    %401 = vector.shape_cast %400 : vector<128xf32> to vector<1x128xf32>
    %402 = vector.broadcast %401 : vector<1x128xf32> to vector<7x128xf32>
    %403 = arith.mulf %398, %402 : vector<7x128xf32>
    %404 = arith.addf %396, %403 : vector<7x128xf32>
    %c0_399 = arith.constant 0 : index
    %c0_400 = arith.constant 0 : index
    %c1_401 = arith.constant 1 : index
    %c640_402 = arith.constant 640 : index
    %405 = vector.load %arg2[%c0_399, %c0_400, %c1_401, %c640_402] : memref<1x1x9x1152xf32, #tpu.memory_space<vmem>>, vector<1x1x7x128xf32>
    %406 = vector.shape_cast %405 : vector<1x1x7x128xf32> to vector<7x128xf32>
    %c0_403 = arith.constant 0 : index
    %c1_404 = arith.constant 1 : index
    %c0_405 = arith.constant 0 : index
    %c0_406 = arith.constant 0 : index
    %407 = vector.load %arg3[%c0_403, %c1_404, %c0_405, %c0_406] : memref<1x3x3x128xf32, #tpu.memory_space<vmem>>, vector<1x1x1x128xf32>
    %408 = vector.shape_cast %407 : vector<1x1x1x128xf32> to vector<128xf32>
    %409 = vector.shape_cast %408 : vector<128xf32> to vector<1x128xf32>
    %410 = vector.broadcast %409 : vector<1x128xf32> to vector<7x128xf32>
    %411 = arith.mulf %406, %410 : vector<7x128xf32>
    %412 = arith.addf %404, %411 : vector<7x128xf32>
    %c0_407 = arith.constant 0 : index
    %c0_408 = arith.constant 0 : index
    %c1_409 = arith.constant 1 : index
    %c768_410 = arith.constant 768 : index
    %413 = vector.load %arg2[%c0_407, %c0_408, %c1_409, %c768_410] : memref<1x1x9x1152xf32, #tpu.memory_space<vmem>>, vector<1x1x7x128xf32>
    %414 = vector.shape_cast %413 : vector<1x1x7x128xf32> to vector<7x128xf32>
    %c0_411 = arith.constant 0 : index
    %c1_412 = arith.constant 1 : index
    %c1_413 = arith.constant 1 : index
    %c0_414 = arith.constant 0 : index
    %415 = vector.load %arg3[%c0_411, %c1_412, %c1_413, %c0_414] : memref<1x3x3x128xf32, #tpu.memory_space<vmem>>, vector<1x1x1x128xf32>
    %416 = vector.shape_cast %415 : vector<1x1x1x128xf32> to vector<128xf32>
    %417 = vector.shape_cast %416 : vector<128xf32> to vector<1x128xf32>
    %418 = vector.broadcast %417 : vector<1x128xf32> to vector<7x128xf32>
    %419 = arith.mulf %414, %418 : vector<7x128xf32>
    %420 = arith.addf %412, %419 : vector<7x128xf32>
    %c0_415 = arith.constant 0 : index
    %c0_416 = arith.constant 0 : index
    %c1_417 = arith.constant 1 : index
    %c896_418 = arith.constant 896 : index
    %421 = vector.load %arg2[%c0_415, %c0_416, %c1_417, %c896_418] : memref<1x1x9x1152xf32, #tpu.memory_space<vmem>>, vector<1x1x7x128xf32>
    %422 = vector.shape_cast %421 : vector<1x1x7x128xf32> to vector<7x128xf32>
    %c0_419 = arith.constant 0 : index
    %c1_420 = arith.constant 1 : index
    %c2_421 = arith.constant 2 : index
    %c0_422 = arith.constant 0 : index
    %423 = vector.load %arg3[%c0_419, %c1_420, %c2_421, %c0_422] : memref<1x3x3x128xf32, #tpu.memory_space<vmem>>, vector<1x1x1x128xf32>
    %424 = vector.shape_cast %423 : vector<1x1x1x128xf32> to vector<128xf32>
    %425 = vector.shape_cast %424 : vector<128xf32> to vector<1x128xf32>
    %426 = vector.broadcast %425 : vector<1x128xf32> to vector<7x128xf32>
    %427 = arith.mulf %422, %426 : vector<7x128xf32>
    %428 = arith.addf %420, %427 : vector<7x128xf32>
    %c0_423 = arith.constant 0 : index
    %c0_424 = arith.constant 0 : index
    %c2_425 = arith.constant 2 : index
    %c640_426 = arith.constant 640 : index
    %429 = vector.load %arg2[%c0_423, %c0_424, %c2_425, %c640_426] : memref<1x1x9x1152xf32, #tpu.memory_space<vmem>>, vector<1x1x7x128xf32>
    %430 = vector.shape_cast %429 : vector<1x1x7x128xf32> to vector<7x128xf32>
    %c0_427 = arith.constant 0 : index
    %c2_428 = arith.constant 2 : index
    %c0_429 = arith.constant 0 : index
    %c0_430 = arith.constant 0 : index
    %431 = vector.load %arg3[%c0_427, %c2_428, %c0_429, %c0_430] : memref<1x3x3x128xf32, #tpu.memory_space<vmem>>, vector<1x1x1x128xf32>
    %432 = vector.shape_cast %431 : vector<1x1x1x128xf32> to vector<128xf32>
    %433 = vector.shape_cast %432 : vector<128xf32> to vector<1x128xf32>
    %434 = vector.broadcast %433 : vector<1x128xf32> to vector<7x128xf32>
    %435 = arith.mulf %430, %434 : vector<7x128xf32>
    %436 = arith.addf %428, %435 : vector<7x128xf32>
    %c0_431 = arith.constant 0 : index
    %c0_432 = arith.constant 0 : index
    %c2_433 = arith.constant 2 : index
    %c768_434 = arith.constant 768 : index
    %437 = vector.load %arg2[%c0_431, %c0_432, %c2_433, %c768_434] : memref<1x1x9x1152xf32, #tpu.memory_space<vmem>>, vector<1x1x7x128xf32>
    %438 = vector.shape_cast %437 : vector<1x1x7x128xf32> to vector<7x128xf32>
    %c0_435 = arith.constant 0 : index
    %c2_436 = arith.constant 2 : index
    %c1_437 = arith.constant 1 : index
    %c0_438 = arith.constant 0 : index
    %439 = vector.load %arg3[%c0_435, %c2_436, %c1_437, %c0_438] : memref<1x3x3x128xf32, #tpu.memory_space<vmem>>, vector<1x1x1x128xf32>
    %440 = vector.shape_cast %439 : vector<1x1x1x128xf32> to vector<128xf32>
    %441 = vector.shape_cast %440 : vector<128xf32> to vector<1x128xf32>
    %442 = vector.broadcast %441 : vector<1x128xf32> to vector<7x128xf32>
    %443 = arith.mulf %438, %442 : vector<7x128xf32>
    %444 = arith.addf %436, %443 : vector<7x128xf32>
    %c0_439 = arith.constant 0 : index
    %c0_440 = arith.constant 0 : index
    %c2_441 = arith.constant 2 : index
    %c896_442 = arith.constant 896 : index
    %445 = vector.load %arg2[%c0_439, %c0_440, %c2_441, %c896_442] : memref<1x1x9x1152xf32, #tpu.memory_space<vmem>>, vector<1x1x7x128xf32>
    %446 = vector.shape_cast %445 : vector<1x1x7x128xf32> to vector<7x128xf32>
    %c0_443 = arith.constant 0 : index
    %c2_444 = arith.constant 2 : index
    %c2_445 = arith.constant 2 : index
    %c0_446 = arith.constant 0 : index
    %447 = vector.load %arg3[%c0_443, %c2_444, %c2_445, %c0_446] : memref<1x3x3x128xf32, #tpu.memory_space<vmem>>, vector<1x1x1x128xf32>
    %448 = vector.shape_cast %447 : vector<1x1x1x128xf32> to vector<128xf32>
    %449 = vector.shape_cast %448 : vector<128xf32> to vector<1x128xf32>
    %450 = vector.broadcast %449 : vector<1x128xf32> to vector<7x128xf32>
    %451 = arith.mulf %446, %450 : vector<7x128xf32>
    %452 = arith.addf %444, %451 : vector<7x128xf32>
    %c0_447 = arith.constant 0 : index
    %c0_448 = arith.constant 0 : index
    %c0_449 = arith.constant 0 : index
    %c640_450 = arith.constant 640 : index
    %453 = vector.load %arg4[%c0_447, %c0_448, %c0_449, %c640_450] : memref<1x1x7x896xf32, #tpu.memory_space<vmem>>, vector<1x1x7x128xf32>
    %454 = vector.shape_cast %453 : vector<1x1x7x128xf32> to vector<7x128xf32>
    %455 = vector.shape_cast %452 : vector<7x128xf32> to vector<1x1x7x128xf32>
    tpu.vector_store %arg4[%c0_447, %c0_448, %c0_449, %c640_450], %455 {strides = array<i32>} : memref<1x1x7x896xf32, #tpu.memory_space<vmem>>, vector<1x1x7x128xf32>,
    %cst_451 = arith.constant 0.000000e+00 : f32
    %456 = vector.broadcast %cst_451 : f32 to vector<7x128xf32>
    %c0_452 = arith.constant 0 : index
    %c0_453 = arith.constant 0 : index
    %c0_454 = arith.constant 0 : index
    %c768_455 = arith.constant 768 : index
    %457 = vector.load %arg2[%c0_452, %c0_453, %c0_454, %c768_455] : memref<1x1x9x1152xf32, #tpu.memory_space<vmem>>, vector<1x1x7x128xf32>
    %458 = vector.shape_cast %457 : vector<1x1x7x128xf32> to vector<7x128xf32>
    %c0_456 = arith.constant 0 : index
    %c0_457 = arith.constant 0 : index
    %c0_458 = arith.constant 0 : index
    %c0_459 = arith.constant 0 : index
    %459 = vector.load %arg3[%c0_456, %c0_457, %c0_458, %c0_459] : memref<1x3x3x128xf32, #tpu.memory_space<vmem>>, vector<1x1x1x128xf32>
    %460 = vector.shape_cast %459 : vector<1x1x1x128xf32> to vector<128xf32>
    %461 = vector.shape_cast %460 : vector<128xf32> to vector<1x128xf32>
    %462 = vector.broadcast %461 : vector<1x128xf32> to vector<7x128xf32>
    %463 = arith.mulf %458, %462 : vector<7x128xf32>
    %464 = arith.addf %456, %463 : vector<7x128xf32>
    %c0_460 = arith.constant 0 : index
    %c0_461 = arith.constant 0 : index
    %c0_462 = arith.constant 0 : index
    %c896_463 = arith.constant 896 : index
    %465 = vector.load %arg2[%c0_460, %c0_461, %c0_462, %c896_463] : memref<1x1x9x1152xf32, #tpu.memory_space<vmem>>, vector<1x1x7x128xf32>
    %466 = vector.shape_cast %465 : vector<1x1x7x128xf32> to vector<7x128xf32>
    %c0_464 = arith.constant 0 : index
    %c0_465 = arith.constant 0 : index
    %c1_466 = arith.constant 1 : index
    %c0_467 = arith.constant 0 : index
    %467 = vector.load %arg3[%c0_464, %c0_465, %c1_466, %c0_467] : memref<1x3x3x128xf32, #tpu.memory_space<vmem>>, vector<1x1x1x128xf32>
    %468 = vector.shape_cast %467 : vector<1x1x1x128xf32> to vector<128xf32>
    %469 = vector.shape_cast %468 : vector<128xf32> to vector<1x128xf32>
    %470 = vector.broadcast %469 : vector<1x128xf32> to vector<7x128xf32>
    %471 = arith.mulf %466, %470 : vector<7x128xf32>
    %472 = arith.addf %464, %471 : vector<7x128xf32>
    %c0_468 = arith.constant 0 : index
    %c0_469 = arith.constant 0 : index
    %c0_470 = arith.constant 0 : index
    %c1024 = arith.constant 1024 : index
    %473 = vector.load %arg2[%c0_468, %c0_469, %c0_470, %c1024] : memref<1x1x9x1152xf32, #tpu.memory_space<vmem>>, vector<1x1x7x128xf32>
    %474 = vector.shape_cast %473 : vector<1x1x7x128xf32> to vector<7x128xf32>
    %c0_471 = arith.constant 0 : index
    %c0_472 = arith.constant 0 : index
    %c2_473 = arith.constant 2 : index
    %c0_474 = arith.constant 0 : index
    %475 = vector.load %arg3[%c0_471, %c0_472, %c2_473, %c0_474] : memref<1x3x3x128xf32, #tpu.memory_space<vmem>>, vector<1x1x1x128xf32>
    %476 = vector.shape_cast %475 : vector<1x1x1x128xf32> to vector<128xf32>
    %477 = vector.shape_cast %476 : vector<128xf32> to vector<1x128xf32>
    %478 = vector.broadcast %477 : vector<1x128xf32> to vector<7x128xf32>
    %479 = arith.mulf %474, %478 : vector<7x128xf32>
    %480 = arith.addf %472, %479 : vector<7x128xf32>
    %c0_475 = arith.constant 0 : index
    %c0_476 = arith.constant 0 : index
    %c1_477 = arith.constant 1 : index
    %c768_478 = arith.constant 768 : index
    %481 = vector.load %arg2[%c0_475, %c0_476, %c1_477, %c768_478] : memref<1x1x9x1152xf32, #tpu.memory_space<vmem>>, vector<1x1x7x128xf32>
    %482 = vector.shape_cast %481 : vector<1x1x7x128xf32> to vector<7x128xf32>
    %c0_479 = arith.constant 0 : index
    %c1_480 = arith.constant 1 : index
    %c0_481 = arith.constant 0 : index
    %c0_482 = arith.constant 0 : index
    %483 = vector.load %arg3[%c0_479, %c1_480, %c0_481, %c0_482] : memref<1x3x3x128xf32, #tpu.memory_space<vmem>>, vector<1x1x1x128xf32>
    %484 = vector.shape_cast %483 : vector<1x1x1x128xf32> to vector<128xf32>
    %485 = vector.shape_cast %484 : vector<128xf32> to vector<1x128xf32>
    %486 = vector.broadcast %485 : vector<1x128xf32> to vector<7x128xf32>
    %487 = arith.mulf %482, %486 : vector<7x128xf32>
    %488 = arith.addf %480, %487 : vector<7x128xf32>
    %c0_483 = arith.constant 0 : index
    %c0_484 = arith.constant 0 : index
    %c1_485 = arith.constant 1 : index
    %c896_486 = arith.constant 896 : index
    %489 = vector.load %arg2[%c0_483, %c0_484, %c1_485, %c896_486] : memref<1x1x9x1152xf32, #tpu.memory_space<vmem>>, vector<1x1x7x128xf32>
    %490 = vector.shape_cast %489 : vector<1x1x7x128xf32> to vector<7x128xf32>
    %c0_487 = arith.constant 0 : index
    %c1_488 = arith.constant 1 : index
    %c1_489 = arith.constant 1 : index
    %c0_490 = arith.constant 0 : index
    %491 = vector.load %arg3[%c0_487, %c1_488, %c1_489, %c0_490] : memref<1x3x3x128xf32, #tpu.memory_space<vmem>>, vector<1x1x1x128xf32>
    %492 = vector.shape_cast %491 : vector<1x1x1x128xf32> to vector<128xf32>
    %493 = vector.shape_cast %492 : vector<128xf32> to vector<1x128xf32>
    %494 = vector.broadcast %493 : vector<1x128xf32> to vector<7x128xf32>
    %495 = arith.mulf %490, %494 : vector<7x128xf32>
    %496 = arith.addf %488, %495 : vector<7x128xf32>
    %c0_491 = arith.constant 0 : index
    %c0_492 = arith.constant 0 : index
    %c1_493 = arith.constant 1 : index
    %c1024_494 = arith.constant 1024 : index
    %497 = vector.load %arg2[%c0_491, %c0_492, %c1_493, %c1024_494] : memref<1x1x9x1152xf32, #tpu.memory_space<vmem>>, vector<1x1x7x128xf32>
    %498 = vector.shape_cast %497 : vector<1x1x7x128xf32> to vector<7x128xf32>
    %c0_495 = arith.constant 0 : index
    %c1_496 = arith.constant 1 : index
    %c2_497 = arith.constant 2 : index
    %c0_498 = arith.constant 0 : index
    %499 = vector.load %arg3[%c0_495, %c1_496, %c2_497, %c0_498] : memref<1x3x3x128xf32, #tpu.memory_space<vmem>>, vector<1x1x1x128xf32>
    %500 = vector.shape_cast %499 : vector<1x1x1x128xf32> to vector<128xf32>
    %501 = vector.shape_cast %500 : vector<128xf32> to vector<1x128xf32>
    %502 = vector.broadcast %501 : vector<1x128xf32> to vector<7x128xf32>
    %503 = arith.mulf %498, %502 : vector<7x128xf32>
    %504 = arith.addf %496, %503 : vector<7x128xf32>
    %c0_499 = arith.constant 0 : index
    %c0_500 = arith.constant 0 : index
    %c2_501 = arith.constant 2 : index
    %c768_502 = arith.constant 768 : index
    %505 = vector.load %arg2[%c0_499, %c0_500, %c2_501, %c768_502] : memref<1x1x9x1152xf32, #tpu.memory_space<vmem>>, vector<1x1x7x128xf32>
    %506 = vector.shape_cast %505 : vector<1x1x7x128xf32> to vector<7x128xf32>
    %c0_503 = arith.constant 0 : index
    %c2_504 = arith.constant 2 : index
    %c0_505 = arith.constant 0 : index
    %c0_506 = arith.constant 0 : index
    %507 = vector.load %arg3[%c0_503, %c2_504, %c0_505, %c0_506] : memref<1x3x3x128xf32, #tpu.memory_space<vmem>>, vector<1x1x1x128xf32>
    %508 = vector.shape_cast %507 : vector<1x1x1x128xf32> to vector<128xf32>
    %509 = vector.shape_cast %508 : vector<128xf32> to vector<1x128xf32>
    %510 = vector.broadcast %509 : vector<1x128xf32> to vector<7x128xf32>
    %511 = arith.mulf %506, %510 : vector<7x128xf32>
    %512 = arith.addf %504, %511 : vector<7x128xf32>
    %c0_507 = arith.constant 0 : index
    %c0_508 = arith.constant 0 : index
    %c2_509 = arith.constant 2 : index
    %c896_510 = arith.constant 896 : index
    %513 = vector.load %arg2[%c0_507, %c0_508, %c2_509, %c896_510] : memref<1x1x9x1152xf32, #tpu.memory_space<vmem>>, vector<1x1x7x128xf32>
    %514 = vector.shape_cast %513 : vector<1x1x7x128xf32> to vector<7x128xf32>
    %c0_511 = arith.constant 0 : index
    %c2_512 = arith.constant 2 : index
    %c1_513 = arith.constant 1 : index
    %c0_514 = arith.constant 0 : index
    %515 = vector.load %arg3[%c0_511, %c2_512, %c1_513, %c0_514] : memref<1x3x3x128xf32, #tpu.memory_space<vmem>>, vector<1x1x1x128xf32>
    %516 = vector.shape_cast %515 : vector<1x1x1x128xf32> to vector<128xf32>
    %517 = vector.shape_cast %516 : vector<128xf32> to vector<1x128xf32>
    %518 = vector.broadcast %517 : vector<1x128xf32> to vector<7x128xf32>
    %519 = arith.mulf %514, %518 : vector<7x128xf32>
    %520 = arith.addf %512, %519 : vector<7x128xf32>
    %c0_515 = arith.constant 0 : index
    %c0_516 = arith.constant 0 : index
    %c2_517 = arith.constant 2 : index
    %c1024_518 = arith.constant 1024 : index
    %521 = vector.load %arg2[%c0_515, %c0_516, %c2_517, %c1024_518] : memref<1x1x9x1152xf32, #tpu.memory_space<vmem>>, vector<1x1x7x128xf32>
    %522 = vector.shape_cast %521 : vector<1x1x7x128xf32> to vector<7x128xf32>
    %c0_519 = arith.constant 0 : index
    %c2_520 = arith.constant 2 : index
    %c2_521 = arith.constant 2 : index
    %c0_522 = arith.constant 0 : index
    %523 = vector.load %arg3[%c0_519, %c2_520, %c2_521, %c0_522] : memref<1x3x3x128xf32, #tpu.memory_space<vmem>>, vector<1x1x1x128xf32>
    %524 = vector.shape_cast %523 : vector<1x1x1x128xf32> to vector<128xf32>
    %525 = vector.shape_cast %524 : vector<128xf32> to vector<1x128xf32>
    %526 = vector.broadcast %525 : vector<1x128xf32> to vector<7x128xf32>
    %527 = arith.mulf %522, %526 : vector<7x128xf32>
    %528 = arith.addf %520, %527 : vector<7x128xf32>
    %c0_523 = arith.constant 0 : index
    %c0_524 = arith.constant 0 : index
    %c0_525 = arith.constant 0 : index
    %c768_526 = arith.constant 768 : index
    %529 = vector.load %arg4[%c0_523, %c0_524, %c0_525, %c768_526] : memref<1x1x7x896xf32, #tpu.memory_space<vmem>>, vector<1x1x7x128xf32>
    %530 = vector.shape_cast %529 : vector<1x1x7x128xf32> to vector<7x128xf32>
    %531 = vector.shape_cast %528 : vector<7x128xf32> to vector<1x1x7x128xf32>
    tpu.vector_store %arg4[%c0_523, %c0_524, %c0_525, %c768_526], %531 {strides = array<i32>} : memref<1x1x7x896xf32, #tpu.memory_space<vmem>>, vector<1x1x7x128xf32>,
    return
  }
  func.func @transform_0(%arg0: i32, %arg1: i32) -> (i32, i32, i32, i32) {
    %c0_i32 = arith.constant 0 : i32
    %c0_i32_0 = arith.constant 0 : i32
    %c0_i32_1 = arith.constant 0 : i32
    return %arg1, %arg0, %c0_i32, %c0_i32_0 : i32, i32, i32, i32
  }
  func.func @transform_1(%arg0: i32, %arg1: i32) -> (i32, i32, i32, i32) {
    %c0_i32 = arith.constant 0 : i32
    %c0_i32_0 = arith.constant 0 : i32
    %c0_i32_1 = arith.constant 0 : i32
    %c0_i32_2 = arith.constant 0 : i32
    return %arg0, %c0_i32, %c0_i32_0, %c0_i32_1 : i32, i32, i32, i32
  }
  func.func @transform_2(%arg0: i32, %arg1: i32) -> (i32, i32, i32, i32) {
    %c0_i32 = arith.constant 0 : i32
    %c0_i32_0 = arith.constant 0 : i32
    %c0_i32_1 = arith.constant 0 : i32
    return %arg1, %arg0, %c0_i32, %c0_i32_0 : i32, i32, i32, i32
  }
}

</mosaic_0001>

<llo_original>
// kernel: depthwise_conv2d_nchw.1
$region0: #{depthwise_conv2d_nchw.1}
  #allocation0 [shape = 'u32[]', space=smem, size = 0x4, offset = 0x4, fixed_abs, tag = 'smem constant byte address 0x4 - core index']
  #allocation1 [shape = 'u32[144,128]{1,0:T(1,128)}', space=vmem, size = 0x12000, scoped, tag = 'internal scratch']
  %s0 = inlined_call_operand.vmem [shape: f32[2,2,9,1152], index: 0, kind: input, shape index: {}]
  %s1 = inlined_call_operand.vmem [shape: f32[2,3,3,128], index: 1, kind: input, shape index: {}]
  %s2 = inlined_call_operand.vmem [shape: f32[2,2,7,896], index: 2, kind: output, shape index: {}]
  %s3 = sld [smem:[#allocation0]]
  $region41: #{depthwise_conv2d_nchw.1} parent=0
    _
  %s5 = ssub.s32 1, %s3
  %s6 = scalar_select 0, %s5, %s3
  loop: start=0, step=1, limit=6
  $region2: #{depthwise_conv2d_nchw.1} parent=0 // loop_pre_header
    _
  $region3: #{depthwise_conv2d_nchw.1} parent=0 // loop_header
    %s8 = sphi 0, %s12
    %p9 = scmp.ge.s32.totalorder %s8, 6
    %s15 = sphi 0, %s27
    %s16 = sphi 0, %s23
    %s17 = sphi 0, %s15
    %s18 = sphi 0, %s16
    %s19 = sphi 0, %s17
    %s20 = sphi 0, %s18
    %s32 = sphi 0, %s34
    %s35 = sphi 0, %s32
    %s36 = sphi 0, %s35
    %s52 = sphi 0, %s36
    %s58 = sphi 0, %s60
    %s61 = sphi 0, %s58
    %s62 = sphi 0, %s61
    %s78 = sphi 0, %s62
    %s86 = sphi 0, %s88
    %s89 = sphi 0, %s86
    %s90 = sphi 0, %s89
    %s106 = sphi 0, %s90
  $region4: #{depthwise_conv2d_nchw.1} parent=0 // loop_header_branch
    %11 = sbr.rel (%p9) target = $region8
  $region5: #{depthwise_conv2d_nchw.1} parent=0 // loop_body
    %s13 = ssub.s32 %s8, 1
    %s14 = ssub.s32 %s8, 2
    %s21 = sadd.s32 1, %s16
    %p22 = scmp.ge.s32.totalorder %s21, 2
    %s23 = scalar_select %p22, 0, %s21
    %s24 = sadd.s32 1, %s15
    %s25 = scalar_select %p22, %s24, %s15
    %p26 = scmp.ge.s32.totalorder %s25, 2
    %s27 = scalar_select %p26, 0, %s25
    %s28 = ssub.s32 %s16, %s23
    %s29 = ssub.s32 %s15, %s27
    %s30 = sor.u32 %s28, %s29
    %p31 = scmp.eq.s32.totalorder %s30, 0
    %s33 = sadd.s32 %s32, 1
    %s34 = scalar_select %p31, %s32, %s33
    %p37 = pneg %p31
    %p38 = scmp.eq.s32.totalorder %s8, 3
    %p39 = por %p37, %p38
    %p40 = scmp.ne.s32.totalorder %s32, %s35
    %p41 = scmp.eq.s32.totalorder %s8, 0
    %p42 = por %p40, %p41
    %p43 = scmp.ne.s32.totalorder %s32, %s35
    %p44 = scmp.eq.s32.totalorder %s13, 3
    %p45 = por %p43, %p44
    %p46 = scmp.ne.s32.totalorder %s35, %s36
    %p47 = scmp.eq.s32.totalorder %s13, 0
    %p48 = por %p46, %p47
    %p49 = scmp.ne.s32.totalorder %s35, %s36
    %p50 = scmp.eq.s32.totalorder %s14, 3
    %p51 = por %p49, %p50
    %p53 = scmp.ne.s32.totalorder %s36, %s52
    %p54 = scmp.eq.s32.totalorder %s14, 0
    %p55 = por %p53, %p54
    %s56 = ssub.s32 %s15, %s27
    %p57 = scmp.eq.s32.totalorder %s56, 0
    %s59 = sadd.s32 %s58, 1
    %s60 = scalar_select %p57, %s58, %s59
    %p63 = pneg %p57
    %p64 = scmp.eq.s32.totalorder %s8, 3
    %p65 = por %p63, %p64
    %p66 = scmp.ne.s32.totalorder %s58, %s61
    %p67 = scmp.eq.s32.totalorder %s8, 0
    %p68 = por %p66, %p67
    %p69 = scmp.ne.s32.totalorder %s58, %s61
    %p70 = scmp.eq.s32.totalorder %s13, 3
    %p71 = por %p69, %p70
    %p72 = scmp.ne.s32.totalorder %s61, %s62
    %p73 = scmp.eq.s32.totalorder %s13, 0
    %p74 = por %p72, %p73
    %p75 = scmp.ne.s32.totalorder %s61, %s62
    %p76 = scmp.eq.s32.totalorder %s14, 3
    %p77 = por %p75, %p76
    %p79 = scmp.ne.s32.totalorder %s62, %s78
    %p80 = scmp.eq.s32.totalorder %s14, 0
    %p81 = por %p79, %p80
    %s82 = ssub.s32 %s16, %s23
    %s83 = ssub.s32 %s15, %s27
    %s84 = sor.u32 %s82, %s83
    %p85 = scmp.eq.s32.totalorder %s84, 0
    %s87 = sadd.s32 %s86, 1
    %s88 = scalar_select %p85, %s86, %s87
    %p91 = pneg %p85
    %p92 = scmp.eq.s32.totalorder %s8, 3
    %p93 = por %p91, %p92
    %p94 = scmp.ne.s32.totalorder %s86, %s89
    %p95 = scmp.eq.s32.totalorder %s8, 0
    %p96 = por %p94, %p95
    %p97 = scmp.ne.s32.totalorder %s86, %s89
    %p98 = scmp.eq.s32.totalorder %s13, 3
    %p99 = por %p97, %p98
    %p100 = scmp.ne.s32.totalorder %s89, %s90
    %p101 = scmp.eq.s32.totalorder %s13, 0
    %p102 = por %p100, %p101
    %p103 = scmp.ne.s32.totalorder %s89, %s90
    %p104 = scmp.eq.s32.totalorder %s14, 3
    %p105 = por %p103, %p104
    %p107 = scmp.ne.s32.totalorder %s90, %s106
    %p108 = scmp.eq.s32.totalorder %s14, 0
    %p109 = por %p107, %p108
    %p110 = scmp.le.s32.totalorder 1, %s8
    %p111 = scmp.lt.s32.totalorder %s8, 5
    %p112 = pnand %p110, %p111
    %p113 = pneg %p112
    // Predicated region
    $region9: #{depthwise_conv2d_nchw.1} parent=5 // pred_check
      _
    $region10: #{depthwise_conv2d_nchw.1} parent=5 // pred_check_branch
      %115 = sbr.rel (%p112) target = $region12
    $region11: #{depthwise_conv2d_nchw.1} parent=5 // pred_region
      %s116 = ssub.s32 %s8, 1
    $region12: #{depthwise_conv2d_nchw.1} parent=5 // pred_fallthru
      _
    %p117 = scmp.lt.s32.totalorder %s8, 4
    // Predicated region
    $region13: #{depthwise_conv2d_nchw.1} parent=5 // pred_check
      %p118 = pneg %p117
    $region14: #{depthwise_conv2d_nchw.1} parent=5 // pred_check_branch
      %120 = sbr.rel (%p118) target = $region16
    $region15: #{depthwise_conv2d_nchw.1} parent=5 // pred_region
      // Predicated region
      $region17: #{depthwise_conv2d_nchw.1} parent=15 // pred_check
        %p121 = pneg %p42
      $region18: #{depthwise_conv2d_nchw.1} parent=15 // pred_check_branch
        %123 = sbr.rel (%p121) target = $region20
      $region19: #{depthwise_conv2d_nchw.1} parent=15 // pred_region
        %p124 = scmp.lt.s32.totalorder %s16, 1
        %s125 = scalar_select %p124, %s16, 1
        %p126 = scmp.lt.s32.totalorder %s15, 1
        %s127 = scalar_select %p126, %s15, 1
        %s128 = smul.addr %s127, 18
        %s129 = smul.addr %s125, 36
        %s130 = sadd.s32 %s128, %s129
        %s131 = smul.addr %s130, 8
        %s132 = scalar_lea.vmem %s0, %s131
      $region20: #{depthwise_conv2d_nchw.1} parent=15 // pred_fallthru
        _
      // Predicated region
      $region21: #{depthwise_conv2d_nchw.1} parent=15 // pred_check
        %p133 = pneg %p68
      $region22: #{depthwise_conv2d_nchw.1} parent=15 // pred_check_branch
        %135 = sbr.rel (%p133) target = $region24
      $region23: #{depthwise_conv2d_nchw.1} parent=15 // pred_region
        %p136 = scmp.lt.s32.totalorder %s15, 1
        %s137 = scalar_select %p136, %s15, 1
        %s138 = smul.addr %s137, 3
        %s139 = smul.addr %s138, 4
        %s140 = scalar_lea.vmem %s1, %s139
      $region24: #{depthwise_conv2d_nchw.1} parent=15 // pred_fallthru
        _
    $region16: #{depthwise_conv2d_nchw.1} parent=5 // pred_fallthru
      _
    %p141 = scmp.le.s32.totalorder 1, %s8
    %p142 = scmp.lt.s32.totalorder %s8, 5
    %p143 = pnand %p141, %p142
    %p144 = pneg %p143
    // Predicated region
    $region25: #{depthwise_conv2d_nchw.1} parent=5 // pred_check
      _
    $region26: #{depthwise_conv2d_nchw.1} parent=5 // pred_check_branch
      %146 = sbr.rel (%p143) target = $region28
    $region27: #{depthwise_conv2d_nchw.1} parent=5 // pred_region
      %s147 = ssub.s32 %s8, 1
      %p148 = scmp.lt.s32.totalorder %s18, 1
      %s149 = scalar_select %p148, %s18, 1
      %p150 = scmp.lt.s32.totalorder %s17, 1
      %s151 = scalar_select %p150, %s17, 1
      %s152 = smul.addr %s151, 18
      %s153 = smul.addr %s149, 36
      %s154 = sadd.s32 %s152, %s153
      %s155 = smul.addr %s154, 8
      %s156 = scalar_lea.vmem %s0, %s155
      %p157 = pneg %p48
      %p158 = pneg %p45
      %p159 = scmp.lt.s32.totalorder %s17, 1
      %s160 = scalar_select %p159, %s17, 1
      %s161 = smul.addr %s160, 3
      %s162 = smul.addr %s161, 4
      %s163 = scalar_lea.vmem %s1, %s162
      %p164 = pneg %p74
      %p165 = pneg %p71
      %p166 = pneg %p102
      %p167 = pneg %p99
      %p168 = scmp.lt.s32.totalorder %s18, 1
      %s169 = scalar_select %p168, %s18, 1
      %p170 = scmp.lt.s32.totalorder %s17, 1
      %s171 = scalar_select %p170, %s17, 1
      %s172 = smul.addr %s171, 7
      %s173 = smul.addr %s169, 14
      %s174 = sadd.s32 %s172, %s173
      %s175 = smul.addr %s174, 8
      %s176 = scalar_lea.vmem %s2, %s175
      %p177 = scmp.lt.s32.totalorder %s18, 1
      %s178 = scalar_select %p177, %s18, 1
      %p179 = scmp.lt.s32.totalorder %s17, 1
      %s180 = scalar_select %p179, %s17, 1
      %s181 = smul.addr %s180, 18
      %s182 = smul.addr %s178, 36
      %s183 = sadd.s32 %s181, %s182
      %s184 = smul.addr %s183, 8
      %s185 = scalar_lea.vmem %s0, %s184
      %p186 = scmp.lt.s32.totalorder %s17, 1
      %s187 = scalar_select %p186, %s17, 1
      %s188 = smul.addr %s187, 3
      %s189 = smul.addr %s188, 4
      %s190 = scalar_lea.vmem %s1, %s189
      %p191 = scmp.lt.s32.totalorder %s18, 1
      %s192 = scalar_select %p191, %s18, 1
      %p193 = scmp.lt.s32.totalorder %s17, 1
      %s194 = scalar_select %p193, %s17, 1
      %s195 = smul.addr %s194, 7
      %s196 = smul.addr %s192, 14
      %s197 = sadd.s32 %s195, %s196
      %s198 = smul.addr %s197, 8
      %s199 = scalar_lea.vmem %s2, %s198
      %v200 = vld [vmem:[%s185] sm:$0x7f]
      %v201 = vld [vmem:[%s190] sm:$0x1]
      %v202 = vlaneseq
      %v203 = vshrl.u32 %v202, 7
      %v204 = vsub.s32 0, %v203
      %v205 = vrot.slane %v201, %v204
      %v206 = vmul.f32 %v200, %v205
      %v207 = vadd.f32 %v206, 0.0
      %v208 = vld [vmem:[%s185 + $0x8] sm:$0x7f]
      %v209 = vld [vmem:[%s190 + $0x1] sm:$0x1]
      %v210 = vlaneseq
      %v211 = vshrl.u32 %v210, 7
      %v212 = vsub.s32 0, %v211
      %v213 = vrot.slane %v209, %v212
      %v214 = vmul.f32 %v208, %v213
      %v215 = vadd.f32 %v207, %v214
      %v216 = vld [vmem:[%s185 + $0x10] sm:$0x7f]
      %v217 = vld [vmem:[%s190 + $0x2] sm:$0x1]
      %v218 = vlaneseq
      %v219 = vshrl.u32 %v218, 7
      %v220 = vsub.s32 0, %v219
      %v221 = vrot.slane %v217, %v220
      %v222 = vmul.f32 %v216, %v221
      %v223 = vadd.f32 %v215, %v222
      %v224 = vld [vmem:[%s185] sm:$0xfe]
      %s225 = scalar_lea.vmem %s190, 4
      %v226 = vld [vmem:[%s225] sm:$0x1]
      %v227 = vlaneseq
      %v228 = vshrl.u32 %v227, 7
      %v229 = vsub.s32 0, %v228
      %v230 = vrot.slane %v226, %v229
      %v231 = vmul.f32 %v224, %v230
      %v233 = vrot.slane %v231, 1
      %v235 = vadd.f32 %v223, %v233
      %v236 = vld [vmem:[%s185 + $0x8] sm:$0xfe]
      %v237 = vld [vmem:[%s225 + $0x1] sm:$0x1]
      %v238 = vlaneseq
      %v239 = vshrl.u32 %v238, 7
      %v240 = vsub.s32 0, %v239
      %v241 = vrot.slane %v237, %v240
      %v242 = vmul.f32 %v236, %v241
      %v244 = vrot.slane %v242, 1
      %v246 = vadd.f32 %v235, %v244
      %v247 = vld [vmem:[%s185 + $0x10] sm:$0xfe]
      %v248 = vld [vmem:[%s225 + $0x2] sm:$0x1]
      %v249 = vlaneseq
      %v250 = vshrl.u32 %v249, 7
      %v251 = vsub.s32 0, %v250
      %v252 = vrot.slane %v248, %v251
      %v253 = vmul.f32 %v247, %v252
      %v255 = vrot.slane %v253, 1
      %v257 = vadd.f32 %v246, %v255
      %v258 = vld [vmem:[%s185] sm:$0xfc]
      %v259 = vld [vmem:[%s185 + $0x48] sm:$0x1]
      %s260 = scalar_lea.vmem %s190, 8
      %v261 = vld [vmem:[%s260] sm:$0x1]
      %v262 = vlaneseq
      %v263 = vshrl.u32 %v262, 7
      %v264 = vsub.s32 0, %v263
      %v265 = vrot.slane %v261, %v264
      %v266 = vmul.f32 %v258, %v265
      %v267 = vmul.f32 %v259, %v265
      %vm270 = vcmask 1045504
      %v271 = vrot.slane %v266, 2
      %v272 = vrot.slane %v267, 2
      %v273 = vsel %vm270, %v271, %v272
      %v275 = vadd.f32 %v257, %v273
      %v276 = vld [vmem:[%s185 + $0x8] sm:$0xfc]
      %v277 = vld [vmem:[%s185 + $0x50] sm:$0x1]
      %v278 = vld [vmem:[%s260 + $0x1] sm:$0x1]
      %v279 = vlaneseq
      %v280 = vshrl.u32 %v279, 7
      %v281 = vsub.s32 0, %v280
      %v282 = vrot.slane %v278, %v281
      %v283 = vmul.f32 %v276, %v282
      %v284 = vmul.f32 %v277, %v282
      %v287 = vrot.slane %v283, 2
      %v288 = vrot.slane %v284, 2
      %v289 = vsel %vm270, %v287, %v288
      %v291 = vadd.f32 %v275, %v289
      %v292 = vld [vmem:[%s185 + $0x10] sm:$0xfc]
      %v293 = vld [vmem:[%s185 + $0x58] sm:$0x1]
      %v294 = vld [vmem:[%s260 + $0x2] sm:$0x1]
      %v295 = vlaneseq
      %v296 = vshrl.u32 %v295, 7
      %v297 = vsub.s32 0, %v296
      %v298 = vrot.slane %v294, %v297
      %v299 = vmul.f32 %v292, %v298
      %v300 = vmul.f32 %v293, %v298
      %v303 = vrot.slane %v299, 2
      %v304 = vrot.slane %v300, 2
      %v305 = vsel %vm270, %v303, %v304
      %v307 = vadd.f32 %v291, %v305
      %308 = vst [vmem:[%s199] sm:$0x7f] %v307
      %v309 = vld [vmem:[%s185 + $0x8] sm:$0x7f]
      %v310 = vld [vmem:[%s190] sm:$0x1]
      %v311 = vlaneseq
      %v312 = vshrl.u32 %v311, 7
      %v313 = vsub.s32 0, %v312
      %v314 = vrot.slane %v310, %v313
      %v315 = vmul.f32 %v309, %v314
      %v316 = vadd.f32 %v315, 0.0
      %v317 = vld [vmem:[%s185 + $0x10] sm:$0x7f]
      %v318 = vld [vmem:[%s190 + $0x1] sm:$0x1]
      %v319 = vlaneseq
      %v320 = vshrl.u32 %v319, 7
      %v321 = vsub.s32 0, %v320
      %v322 = vrot.slane %v318, %v321
      %v323 = vmul.f32 %v317, %v322
      %v324 = vadd.f32 %v316, %v323
      %v325 = vld [vmem:[%s185 + $0x18] sm:$0x7f]
      %v326 = vld [vmem:[%s190 + $0x2] sm:$0x1]
      %v327 = vlaneseq
      %v328 = vshrl.u32 %v327, 7
      %v329 = vsub.s32 0, %v328
      %v330 = vrot.slane %v326, %v329
      %v331 = vmul.f32 %v325, %v330
      %v332 = vadd.f32 %v324, %v331
      %v333 = vld [vmem:[%s185 + $0x8] sm:$0xfe]
      %v334 = vld [vmem:[%s225] sm:$0x1]
      %v335 = vlaneseq
      %v336 = vshrl.u32 %v335, 7
      %v337 = vsub.s32 0, %v336
      %v338 = vrot.slane %v334, %v337
      %v339 = vmul.f32 %v333, %v338
      %v341 = vrot.slane %v339, 1
      %v343 = vadd.f32 %v332, %v341
      %v344 = vld [vmem:[%s185 + $0x10] sm:$0xfe]
      %v345 = vld [vmem:[%s225 + $0x1] sm:$0x1]
      %v346 = vlaneseq
      %v347 = vshrl.u32 %v346, 7
      %v348 = vsub.s32 0, %v347
      %v349 = vrot.slane %v345, %v348
      %v350 = vmul.f32 %v344, %v349
      %v352 = vrot.slane %v350, 1
      %v354 = vadd.f32 %v343, %v352
      %v355 = vld [vmem:[%s185 + $0x18] sm:$0xfe]
      %v356 = vld [vmem:[%s225 + $0x2] sm:$0x1]
      %v357 = vlaneseq
      %v358 = vshrl.u32 %v357, 7
      %v359 = vsub.s32 0, %v358
      %v360 = vrot.slane %v356, %v359
      %v361 = vmul.f32 %v355, %v360
      %v363 = vrot.slane %v361, 1
      %v365 = vadd.f32 %v354, %v363
      %v366 = vld [vmem:[%s185 + $0x8] sm:$0xfc]
      %v367 = vld [vmem:[%s185 + $0x50] sm:$0x1]
      %v368 = vld [vmem:[%s260] sm:$0x1]
      %v369 = vlaneseq
      %v370 = vshrl.u32 %v369, 7
      %v371 = vsub.s32 0, %v370
      %v372 = vrot.slane %v368, %v371
      %v373 = vmul.f32 %v366, %v372
      %v374 = vmul.f32 %v367, %v372
      %v377 = vrot.slane %v373, 2
      %v378 = vrot.slane %v374, 2
      %v379 = vsel %vm270, %v377, %v378
      %v381 = vadd.f32 %v365, %v379
      %v382 = vld [vmem:[%s185 + $0x10] sm:$0xfc]
      %v383 = vld [vmem:[%s185 + $0x58] sm:$0x1]
      %v384 = vld [vmem:[%s260 + $0x1] sm:$0x1]
      %v385 = vlaneseq
      %v386 = vshrl.u32 %v385, 7
      %v387 = vsub.s32 0, %v386
      %v388 = vrot.slane %v384, %v387
      %v389 = vmul.f32 %v382, %v388
      %v390 = vmul.f32 %v383, %v388
      %v393 = vrot.slane %v389, 2
      %v394 = vrot.slane %v390, 2
      %v395 = vsel %vm270, %v393, %v394
      %v397 = vadd.f32 %v381, %v395
      %v398 = vld [vmem:[%s185 + $0x18] sm:$0xfc]
      %v399 = vld [vmem:[%s185 + $0x60] sm:$0x1]
      %v400 = vld [vmem:[%s260 + $0x2] sm:$0x1]
      %v401 = vlaneseq
      %v402 = vshrl.u32 %v401, 7
      %v403 = vsub.s32 0, %v402
      %v404 = vrot.slane %v400, %v403
      %v405 = vmul.f32 %v398, %v404
      %v406 = vmul.f32 %v399, %v404
      %v409 = vrot.slane %v405, 2
      %v410 = vrot.slane %v406, 2
      %v411 = vsel %vm270, %v409, %v410
      %v413 = vadd.f32 %v397, %v411
      %414 = vst [vmem:[%s199 + $0x8] sm:$0x7f] %v413
      %v415 = vld [vmem:[%s185 + $0x10] sm:$0x7f]
      %v416 = vld [vmem:[%s190] sm:$0x1]
      %v417 = vlaneseq
      %v418 = vshrl.u32 %v417, 7
      %v419 = vsub.s32 0, %v418
      %v420 = vrot.slane %v416, %v419
      %v421 = vmul.f32 %v415, %v420
      %v422 = vadd.f32 %v421, 0.0
      %v423 = vld [vmem:[%s185 + $0x18] sm:$0x7f]
      %v424 = vld [vmem:[%s190 + $0x1] sm:$0x1]
      %v425 = vlaneseq
      %v426 = vshrl.u32 %v425, 7
      %v427 = vsub.s32 0, %v426
      %v428 = vrot.slane %v424, %v427
      %v429 = vmul.f32 %v423, %v428
      %v430 = vadd.f32 %v422, %v429
      %v431 = vld [vmem:[%s185 + $0x20] sm:$0x7f]
      %v432 = vld [vmem:[%s190 + $0x2] sm:$0x1]
      %v433 = vlaneseq
      %v434 = vshrl.u32 %v433, 7
      %v435 = vsub.s32 0, %v434
      %v436 = vrot.slane %v432, %v435
      %v437 = vmul.f32 %v431, %v436
      %v438 = vadd.f32 %v430, %v437
      %v439 = vld [vmem:[%s185 + $0x10] sm:$0xfe]
      %v440 = vld [vmem:[%s225] sm:$0x1]
      %v441 = vlaneseq
      %v442 = vshrl.u32 %v441, 7
      %v443 = vsub.s32 0, %v442
      %v444 = vrot.slane %v440, %v443
      %v445 = vmul.f32 %v439, %v444
      %v447 = vrot.slane %v445, 1
      %v449 = vadd.f32 %v438, %v447
      %v450 = vld [vmem:[%s185 + $0x18] sm:$0xfe]
      %v451 = vld [vmem:[%s225 + $0x1] sm:$0x1]
      %v452 = vlaneseq
      %v453 = vshrl.u32 %v452, 7
      %v454 = vsub.s32 0, %v453
      %v455 = vrot.slane %v451, %v454
      %v456 = vmul.f32 %v450, %v455
      %v458 = vrot.slane %v456, 1
      %v460 = vadd.f32 %v449, %v458
      %v461 = vld [vmem:[%s185 + $0x20] sm:$0xfe]
      %v462 = vld [vmem:[%s225 + $0x2] sm:$0x1]
      %v463 = vlaneseq
      %v464 = vshrl.u32 %v463, 7
      %v465 = vsub.s32 0, %v464
      %v466 = vrot.slane %v462, %v465
      %v467 = vmul.f32 %v461, %v466
      %v469 = vrot.slane %v467, 1
      %v471 = vadd.f32 %v460, %v469
      %v472 = vld [vmem:[%s185 + $0x10] sm:$0xfc]
      %v473 = vld [vmem:[%s185 + $0x58] sm:$0x1]
      %v474 = vld [vmem:[%s260] sm:$0x1]
      %v475 = vlaneseq
      %v476 = vshrl.u32 %v475, 7
      %v477 = vsub.s32 0, %v476
      %v478 = vrot.slane %v474, %v477
      %v479 = vmul.f32 %v472, %v478
      %v480 = vmul.f32 %v473, %v478
      %v483 = vrot.slane %v479, 2
      %v484 = vrot.slane %v480, 2
      %v485 = vsel %vm270, %v483, %v484
      %v487 = vadd.f32 %v471, %v485
      %v488 = vld [vmem:[%s185 + $0x18] sm:$0xfc]
      %v489 = vld [vmem:[%s185 + $0x60] sm:$0x1]
      %v490 = vld [vmem:[%s260 + $0x1] sm:$0x1]
      %v491 = vlaneseq
      %v492 = vshrl.u32 %v491, 7
      %v493 = vsub.s32 0, %v492
      %v494 = vrot.slane %v490, %v493
      %v495 = vmul.f32 %v488, %v494
      %v496 = vmul.f32 %v489, %v494
      %v499 = vrot.slane %v495, 2
      %v500 = vrot.slane %v496, 2
      %v501 = vsel %vm270, %v499, %v500
      %v503 = vadd.f32 %v487, %v501
      %v504 = vld [vmem:[%s185 + $0x20] sm:$0xfc]
      %v505 = vld [vmem:[%s185 + $0x68] sm:$0x1]
      %v506 = vld [vmem:[%s260 + $0x2] sm:$0x1]
      %v507 = vlaneseq
      %v508 = vshrl.u32 %v507, 7
      %v509 = vsub.s32 0, %v508
      %v510 = vrot.slane %v506, %v509
      %v511 = vmul.f32 %v504, %v510
      %v512 = vmul.f32 %v505, %v510
      %v515 = vrot.slane %v511, 2
      %v516 = vrot.slane %v512, 2
      %v517 = vsel %vm270, %v515, %v516
      %v519 = vadd.f32 %v503, %v517
      %520 = vst [vmem:[%s199 + $0x10] sm:$0x7f] %v519
      %v521 = vld [vmem:[%s185 + $0x18] sm:$0x7f]
      %v522 = vld [vmem:[%s190] sm:$0x1]
      %v523 = vlaneseq
      %v524 = vshrl.u32 %v523, 7
      %v525 = vsub.s32 0, %v524
      %v526 = vrot.slane %v522, %v525
      %v527 = vmul.f32 %v521, %v526
      %v528 = vadd.f32 %v527, 0.0
      %v529 = vld [vmem:[%s185 + $0x20] sm:$0x7f]
      %v530 = vld [vmem:[%s190 + $0x1] sm:$0x1]
      %v531 = vlaneseq
      %v532 = vshrl.u32 %v531, 7
      %v533 = vsub.s32 0, %v532
      %v534 = vrot.slane %v530, %v533
      %v535 = vmul.f32 %v529, %v534
      %v536 = vadd.f32 %v528, %v535
      %v537 = vld [vmem:[%s185 + $0x28] sm:$0x7f]
      %v538 = vld [vmem:[%s190 + $0x2] sm:$0x1]
      %v539 = vlaneseq
      %v540 = vshrl.u32 %v539, 7
      %v541 = vsub.s32 0, %v540
      %v542 = vrot.slane %v538, %v541
      %v543 = vmul.f32 %v537, %v542
      %v544 = vadd.f32 %v536, %v543
      %v545 = vld [vmem:[%s185 + $0x18] sm:$0xfe]
      %v546 = vld [vmem:[%s225] sm:$0x1]
      %v547 = vlaneseq
      %v548 = vshrl.u32 %v547, 7
      %v549 = vsub.s32 0, %v548
      %v550 = vrot.slane %v546, %v549
      %v551 = vmul.f32 %v545, %v550
      %v553 = vrot.slane %v551, 1
      %v555 = vadd.f32 %v544, %v553
      %v556 = vld [vmem:[%s185 + $0x20] sm:$0xfe]
      %v557 = vld [vmem:[%s225 + $0x1] sm:$0x1]
      %v558 = vlaneseq
      %v559 = vshrl.u32 %v558, 7
      %v560 = vsub.s32 0, %v559
      %v561 = vrot.slane %v557, %v560
      %v562 = vmul.f32 %v556, %v561
      %v564 = vrot.slane %v562, 1
      %v566 = vadd.f32 %v555, %v564
      %v567 = vld [vmem:[%s185 + $0x28] sm:$0xfe]
      %v568 = vld [vmem:[%s225 + $0x2] sm:$0x1]
      %v569 = vlaneseq
      %v570 = vshrl.u32 %v569, 7
      %v571 = vsub.s32 0, %v570
      %v572 = vrot.slane %v568, %v571
      %v573 = vmul.f32 %v567, %v572
      %v575 = vrot.slane %v573, 1
      %v577 = vadd.f32 %v566, %v575
      %v578 = vld [vmem:[%s185 + $0x18] sm:$0xfc]
      %v579 = vld [vmem:[%s185 + $0x60] sm:$0x1]
      %v580 = vld [vmem:[%s260] sm:$0x1]
      %v581 = vlaneseq
      %v582 = vshrl.u32 %v581, 7
      %v583 = vsub.s32 0, %v582
      %v584 = vrot.slane %v580, %v583
      %v585 = vmul.f32 %v578, %v584
      %v586 = vmul.f32 %v579, %v584
      %v589 = vrot.slane %v585, 2
      %v590 = vrot.slane %v586, 2
      %v591 = vsel %vm270, %v589, %v590
      %v593 = vadd.f32 %v577, %v591
      %v594 = vld [vmem:[%s185 + $0x20] sm:$0xfc]
      %v595 = vld [vmem:[%s185 + $0x68] sm:$0x1]
      %v596 = vld [vmem:[%s260 + $0x1] sm:$0x1]
      %v597 = vlaneseq
      %v598 = vshrl.u32 %v597, 7
      %v599 = vsub.s32 0, %v598
      %v600 = vrot.slane %v596, %v599
      %v601 = vmul.f32 %v594, %v600
      %v602 = vmul.f32 %v595, %v600
      %v605 = vrot.slane %v601, 2
      %v606 = vrot.slane %v602, 2
      %v607 = vsel %vm270, %v605, %v606
      %v609 = vadd.f32 %v593, %v607
      %v610 = vld [vmem:[%s185 + $0x28] sm:$0xfc]
      %v611 = vld [vmem:[%s185 + $0x70] sm:$0x1]
      %v612 = vld [vmem:[%s260 + $0x2] sm:$0x1]
      %v613 = vlaneseq
      %v614 = vshrl.u32 %v613, 7
      %v615 = vsub.s32 0, %v614
      %v616 = vrot.slane %v612, %v615
      %v617 = vmul.f32 %v610, %v616
      %v618 = vmul.f32 %v611, %v616
      %v621 = vrot.slane %v617, 2
      %v622 = vrot.slane %v618, 2
      %v623 = vsel %vm270, %v621, %v622
      %v625 = vadd.f32 %v609, %v623
      %626 = vst [vmem:[%s199 + $0x18] sm:$0x7f] %v625
      %v627 = vld [vmem:[%s185 + $0x20] sm:$0x7f]
      %v628 = vld [vmem:[%s190] sm:$0x1]
      %v629 = vlaneseq
      %v630 = vshrl.u32 %v629, 7
      %v631 = vsub.s32 0, %v630
      %v632 = vrot.slane %v628, %v631
      %v633 = vmul.f32 %v627, %v632
      %v634 = vadd.f32 %v633, 0.0
      %v635 = vld [vmem:[%s185 + $0x28] sm:$0x7f]
      %v636 = vld [vmem:[%s190 + $0x1] sm:$0x1]
      %v637 = vlaneseq
      %v638 = vshrl.u32 %v637, 7
      %v639 = vsub.s32 0, %v638
      %v640 = vrot.slane %v636, %v639
      %v641 = vmul.f32 %v635, %v640
      %v642 = vadd.f32 %v634, %v641
      %v643 = vld [vmem:[%s185 + $0x30] sm:$0x7f]
      %v644 = vld [vmem:[%s190 + $0x2] sm:$0x1]
      %v645 = vlaneseq
      %v646 = vshrl.u32 %v645, 7
      %v647 = vsub.s32 0, %v646
      %v648 = vrot.slane %v644, %v647
      %v649 = vmul.f32 %v643, %v648
      %v650 = vadd.f32 %v642, %v649
      %v651 = vld [vmem:[%s185 + $0x20] sm:$0xfe]
      %v652 = vld [vmem:[%s225] sm:$0x1]
      %v653 = vlaneseq
      %v654 = vshrl.u32 %v653, 7
      %v655 = vsub.s32 0, %v654
      %v656 = vrot.slane %v652, %v655
      %v657 = vmul.f32 %v651, %v656
      %v659 = vrot.slane %v657, 1
      %v661 = vadd.f32 %v650, %v659
      %v662 = vld [vmem:[%s185 + $0x28] sm:$0xfe]
      %v663 = vld [vmem:[%s225 + $0x1] sm:$0x1]
      %v664 = vlaneseq
      %v665 = vshrl.u32 %v664, 7
      %v666 = vsub.s32 0, %v665
      %v667 = vrot.slane %v663, %v666
      %v668 = vmul.f32 %v662, %v667
      %v670 = vrot.slane %v668, 1
      %v672 = vadd.f32 %v661, %v670
      %v673 = vld [vmem:[%s185 + $0x30] sm:$0xfe]
      %v674 = vld [vmem:[%s225 + $0x2] sm:$0x1]
      %v675 = vlaneseq
      %v676 = vshrl.u32 %v675, 7
      %v677 = vsub.s32 0, %v676
      %v678 = vrot.slane %v674, %v677
      %v679 = vmul.f32 %v673, %v678
      %v681 = vrot.slane %v679, 1
      %v683 = vadd.f32 %v672, %v681
      %v684 = vld [vmem:[%s185 + $0x20] sm:$0xfc]
      %v685 = vld [vmem:[%s185 + $0x68] sm:$0x1]
      %v686 = vld [vmem:[%s260] sm:$0x1]
      %v687 = vlaneseq
      %v688 = vshrl.u32 %v687, 7
      %v689 = vsub.s32 0, %v688
      %v690 = vrot.slane %v686, %v689
      %v691 = vmul.f32 %v684, %v690
      %v692 = vmul.f32 %v685, %v690
      %v695 = vrot.slane %v691, 2
      %v696 = vrot.slane %v692, 2
      %v697 = vsel %vm270, %v695, %v696
      %v699 = vadd.f32 %v683, %v697
      %v700 = vld [vmem:[%s185 + $0x28] sm:$0xfc]
      %v701 = vld [vmem:[%s185 + $0x70] sm:$0x1]
      %v702 = vld [vmem:[%s260 + $0x1] sm:$0x1]
      %v703 = vlaneseq
      %v704 = vshrl.u32 %v703, 7
      %v705 = vsub.s32 0, %v704
      %v706 = vrot.slane %v702, %v705
      %v707 = vmul.f32 %v700, %v706
      %v708 = vmul.f32 %v701, %v706
      %v711 = vrot.slane %v707, 2
      %v712 = vrot.slane %v708, 2
      %v713 = vsel %vm270, %v711, %v712
      %v715 = vadd.f32 %v699, %v713
      %v716 = vld [vmem:[%s185 + $0x30] sm:$0xfc]
      %v717 = vld [vmem:[%s185 + $0x78] sm:$0x1]
      %v718 = vld [vmem:[%s260 + $0x2] sm:$0x1]
      %v719 = vlaneseq
      %v720 = vshrl.u32 %v719, 7
      %v721 = vsub.s32 0, %v720
      %v722 = vrot.slane %v718, %v721
      %v723 = vmul.f32 %v716, %v722
      %v724 = vmul.f32 %v717, %v722
      %v727 = vrot.slane %v723, 2
      %v728 = vrot.slane %v724, 2
      %v729 = vsel %vm270, %v727, %v728
      %v731 = vadd.f32 %v715, %v729
      %732 = vst [vmem:[%s199 + $0x20] sm:$0x7f] %v731
      %v733 = vld [vmem:[%s185 + $0x28] sm:$0x7f]
      %v734 = vld [vmem:[%s190] sm:$0x1]
      %v735 = vlaneseq
      %v736 = vshrl.u32 %v735, 7
      %v737 = vsub.s32 0, %v736
      %v738 = vrot.slane %v734, %v737
      %v739 = vmul.f32 %v733, %v738
      %v740 = vadd.f32 %v739, 0.0
      %v741 = vld [vmem:[%s185 + $0x30] sm:$0x7f]
      %v742 = vld [vmem:[%s190 + $0x1] sm:$0x1]
      %v743 = vlaneseq
      %v744 = vshrl.u32 %v743, 7
      %v745 = vsub.s32 0, %v744
      %v746 = vrot.slane %v742, %v745
      %v747 = vmul.f32 %v741, %v746
      %v748 = vadd.f32 %v740, %v747
      %v749 = vld [vmem:[%s185 + $0x38] sm:$0x7f]
      %v750 = vld [vmem:[%s190 + $0x2] sm:$0x1]
      %v751 = vlaneseq
      %v752 = vshrl.u32 %v751, 7
      %v753 = vsub.s32 0, %v752
      %v754 = vrot.slane %v750, %v753
      %v755 = vmul.f32 %v749, %v754
      %v756 = vadd.f32 %v748, %v755
      %v757 = vld [vmem:[%s185 + $0x28] sm:$0xfe]
      %v758 = vld [vmem:[%s225] sm:$0x1]
      %v759 = vlaneseq
      %v760 = vshrl.u32 %v759, 7
      %v761 = vsub.s32 0, %v760
      %v762 = vrot.slane %v758, %v761
      %v763 = vmul.f32 %v757, %v762
      %v765 = vrot.slane %v763, 1
      %v767 = vadd.f32 %v756, %v765
      %v768 = vld [vmem:[%s185 + $0x30] sm:$0xfe]
      %v769 = vld [vmem:[%s225 + $0x1] sm:$0x1]
      %v770 = vlaneseq
      %v771 = vshrl.u32 %v770, 7
      %v772 = vsub.s32 0, %v771
      %v773 = vrot.slane %v769, %v772
      %v774 = vmul.f32 %v768, %v773
      %v776 = vrot.slane %v774, 1
      %v778 = vadd.f32 %v767, %v776
      %v779 = vld [vmem:[%s185 + $0x38] sm:$0xfe]
      %v780 = vld [vmem:[%s225 + $0x2] sm:$0x1]
      %v781 = vlaneseq
      %v782 = vshrl.u32 %v781, 7
      %v783 = vsub.s32 0, %v782
      %v784 = vrot.slane %v780, %v783
      %v785 = vmul.f32 %v779, %v784
      %v787 = vrot.slane %v785, 1
      %v789 = vadd.f32 %v778, %v787
      %v790 = vld [vmem:[%s185 + $0x28] sm:$0xfc]
      %v791 = vld [vmem:[%s185 + $0x70] sm:$0x1]
      %v792 = vld [vmem:[%s260] sm:$0x1]
      %v793 = vlaneseq
      %v794 = vshrl.u32 %v793, 7
      %v795 = vsub.s32 0, %v794
      %v796 = vrot.slane %v792, %v795
      %v797 = vmul.f32 %v790, %v796
      %v798 = vmul.f32 %v791, %v796
      %v801 = vrot.slane %v797, 2
      %v802 = vrot.slane %v798, 2
      %v803 = vsel %vm270, %v801, %v802
      %v805 = vadd.f32 %v789, %v803
      %v806 = vld [vmem:[%s185 + $0x30] sm:$0xfc]
      %v807 = vld [vmem:[%s185 + $0x78] sm:$0x1]
      %v808 = vld [vmem:[%s260 + $0x1] sm:$0x1]
      %v809 = vlaneseq
      %v810 = vshrl.u32 %v809, 7
      %v811 = vsub.s32 0, %v810
      %v812 = vrot.slane %v808, %v811
      %v813 = vmul.f32 %v806, %v812
      %v814 = vmul.f32 %v807, %v812
      %v817 = vrot.slane %v813, 2
      %v818 = vrot.slane %v814, 2
      %v819 = vsel %vm270, %v817, %v818
      %v821 = vadd.f32 %v805, %v819
      %v822 = vld [vmem:[%s185 + $0x38] sm:$0xfc]
      %v823 = vld [vmem:[%s185 + $0x80] sm:$0x1]
      %v824 = vld [vmem:[%s260 + $0x2] sm:$0x1]
      %v825 = vlaneseq
      %v826 = vshrl.u32 %v825, 7
      %v827 = vsub.s32 0, %v826
      %v828 = vrot.slane %v824, %v827
      %v829 = vmul.f32 %v822, %v828
      %v830 = vmul.f32 %v823, %v828
      %v833 = vrot.slane %v829, 2
      %v834 = vrot.slane %v830, 2
      %v835 = vsel %vm270, %v833, %v834
      %v837 = vadd.f32 %v821, %v835
      %838 = vst [vmem:[%s199 + $0x28] sm:$0x7f] %v837
      %v839 = vld [vmem:[%s185 + $0x30] sm:$0x7f]
      %v840 = vld [vmem:[%s190] sm:$0x1]
      %v841 = vlaneseq
      %v842 = vshrl.u32 %v841, 7
      %v843 = vsub.s32 0, %v842
      %v844 = vrot.slane %v840, %v843
      %v845 = vmul.f32 %v839, %v844
      %v846 = vadd.f32 %v845, 0.0
      %v847 = vld [vmem:[%s185 + $0x38] sm:$0x7f]
      %v848 = vld [vmem:[%s190 + $0x1] sm:$0x1]
      %v849 = vlaneseq
      %v850 = vshrl.u32 %v849, 7
      %v851 = vsub.s32 0, %v850
      %v852 = vrot.slane %v848, %v851
      %v853 = vmul.f32 %v847, %v852
      %v854 = vadd.f32 %v846, %v853
      %v855 = vld [vmem:[%s185 + $0x40] sm:$0x7f]
      %v856 = vld [vmem:[%s190 + $0x2] sm:$0x1]
      %v857 = vlaneseq
      %v858 = vshrl.u32 %v857, 7
      %v859 = vsub.s32 0, %v858
      %v860 = vrot.slane %v856, %v859
      %v861 = vmul.f32 %v855, %v860
      %v862 = vadd.f32 %v854, %v861
      %v863 = vld [vmem:[%s185 + $0x30] sm:$0xfe]
      %v864 = vld [vmem:[%s225] sm:$0x1]
      %v865 = vlaneseq
      %v866 = vshrl.u32 %v865, 7
      %v867 = vsub.s32 0, %v866
      %v868 = vrot.slane %v864, %v867
      %v869 = vmul.f32 %v863, %v868
      %v871 = vrot.slane %v869, 1
      %v873 = vadd.f32 %v862, %v871
      %v874 = vld [vmem:[%s185 + $0x38] sm:$0xfe]
      %v875 = vld [vmem:[%s225 + $0x1] sm:$0x1]
      %v876 = vlaneseq
      %v877 = vshrl.u32 %v876, 7
      %v878 = vsub.s32 0, %v877
      %v879 = vrot.slane %v875, %v878
      %v880 = vmul.f32 %v874, %v879
      %v882 = vrot.slane %v880, 1
      %v884 = vadd.f32 %v873, %v882
      %v885 = vld [vmem:[%s185 + $0x40] sm:$0xfe]
      %v886 = vld [vmem:[%s225 + $0x2] sm:$0x1]
      %v887 = vlaneseq
      %v888 = vshrl.u32 %v887, 7
      %v889 = vsub.s32 0, %v888
      %v890 = vrot.slane %v886, %v889
      %v891 = vmul.f32 %v885, %v890
      %v893 = vrot.slane %v891, 1
      %v895 = vadd.f32 %v884, %v893
      %v896 = vld [vmem:[%s185 + $0x30] sm:$0xfc]
      %v897 = vld [vmem:[%s185 + $0x78] sm:$0x1]
      %v898 = vld [vmem:[%s260] sm:$0x1]
      %v899 = vlaneseq
      %v900 = vshrl.u32 %v899, 7
      %v901 = vsub.s32 0, %v900
      %v902 = vrot.slane %v898, %v901
      %v903 = vmul.f32 %v896, %v902
      %v904 = vmul.f32 %v897, %v902
      %v907 = vrot.slane %v903, 2
      %v908 = vrot.slane %v904, 2
      %v909 = vsel %vm270, %v907, %v908
      %v911 = vadd.f32 %v895, %v909
      %v912 = vld [vmem:[%s185 + $0x38] sm:$0xfc]
      %v913 = vld [vmem:[%s185 + $0x80] sm:$0x1]
      %v914 = vld [vmem:[%s260 + $0x1] sm:$0x1]
      %v915 = vlaneseq
      %v916 = vshrl.u32 %v915, 7
      %v917 = vsub.s32 0, %v916
      %v918 = vrot.slane %v914, %v917
      %v919 = vmul.f32 %v912, %v918
      %v920 = vmul.f32 %v913, %v918
      %v923 = vrot.slane %v919, 2
      %v924 = vrot.slane %v920, 2
      %v925 = vsel %vm270, %v923, %v924
      %v927 = vadd.f32 %v911, %v925
      %v928 = vld [vmem:[%s185 + $0x40] sm:$0xfc]
      %v929 = vld [vmem:[%s185 + $0x88] sm:$0x1]
      %v930 = vld [vmem:[%s260 + $0x2] sm:$0x1]
      %v931 = vlaneseq
      %v932 = vshrl.u32 %v931, 7
      %v933 = vsub.s32 0, %v932
      %v934 = vrot.slane %v930, %v933
      %v935 = vmul.f32 %v928, %v934
      %v936 = vmul.f32 %v929, %v934
      %v939 = vrot.slane %v935, 2
      %v940 = vrot.slane %v936, 2
      %v941 = vsel %vm270, %v939, %v940
      %v943 = vadd.f32 %v927, %v941
      %944 = vst [vmem:[%s199 + $0x30] sm:$0x7f] %v943
      %p945 = scmp.lt.s32.totalorder %s18, 1
      %s946 = scalar_select %p945, %s18, 1
      %p947 = scmp.lt.s32.totalorder %s17, 1
      %s948 = scalar_select %p947, %s17, 1
      %s949 = smul.addr %s948, 7
      %s950 = smul.addr %s946, 14
      %s951 = sadd.s32 %s949, %s950
      %s952 = smul.addr %s951, 8
      %s953 = scalar_lea.vmem %s2, %s952
      // Predicated region
      $region29: #{depthwise_conv2d_nchw.1} parent=27 // pred_check
        %p954 = pneg %p99
      $region30: #{depthwise_conv2d_nchw.1} parent=27 // pred_check_branch
        %956 = sbr.rel (%p954) target = $region32
      $region31: #{depthwise_conv2d_nchw.1} parent=27 // pred_region
        _
      $region32: #{depthwise_conv2d_nchw.1} parent=27 // pred_fallthru
        _
    $region28: #{depthwise_conv2d_nchw.1} parent=5 // pred_fallthru
      _
    %p957 = scmp.le.s32.totalorder 2, %s8
    // Predicated region
    $region33: #{depthwise_conv2d_nchw.1} parent=5 // pred_check
      %p958 = pneg %p957
    $region34: #{depthwise_conv2d_nchw.1} parent=5 // pred_check_branch
      %960 = sbr.rel (%p958) target = $region36
    $region35: #{depthwise_conv2d_nchw.1} parent=5 // pred_region
      %s961 = ssub.s32 %s8, 2
      // Predicated region
      $region37: #{depthwise_conv2d_nchw.1} parent=35 // pred_check
        %p962 = pneg %p105
      $region38: #{depthwise_conv2d_nchw.1} parent=35 // pred_check_branch
        %964 = sbr.rel (%p962) target = $region40
      $region39: #{depthwise_conv2d_nchw.1} parent=35 // pred_region
        %p965 = scmp.lt.s32.totalorder %s20, 1
        %s966 = scalar_select %p965, %s20, 1
        %p967 = scmp.lt.s32.totalorder %s19, 1
        %s968 = scalar_select %p967, %s19, 1
        %s969 = smul.addr %s968, 7
        %s970 = smul.addr %s966, 14
        %s971 = sadd.s32 %s969, %s970
        %s972 = smul.addr %s971, 8
        %s973 = scalar_lea.vmem %s2, %s972
      $region40: #{depthwise_conv2d_nchw.1} parent=35 // pred_fallthru
        _
    $region36: #{depthwise_conv2d_nchw.1} parent=5 // pred_fallthru
      _
  $region6: #{depthwise_conv2d_nchw.1} parent=0 // loop_footer
    %s12 = sadd.s32 1, %s8
  $region7: #{depthwise_conv2d_nchw.1} parent=0 // loop_footer_branch
    %7 = sbr.rel target = $region3
  $region8: #{depthwise_conv2d_nchw.1} parent=0 // loop_exit
    _

</llo_original>
